<compile_context>
chip_gen: v5e
topology: v5e:2x2
jax: 0.10.0
libtpu: 0.0.40
codegen_flags: <defaults>
</compile_context>

<pallas_src>
import functools
import math

import jax
import jax.numpy as jnp
import numpy as np
from jax.experimental import pallas as pl
from jax.experimental.pallas import tpu as pltpu


def _round_up(x, m):
    return ((x + m - 1) // m) * m


# ----------------------------------------------------------------------------
# Fused forward kernel
#   grid = (batch_blocks, time_blocks); time axis is the sequential one.
#   LSTM state (bb, H) lives in VMEM scratch across the time axis; the
#   weighted-sum + (folded) LayerNorm/Linear + ReLU head runs in the last
#   time block.
# ----------------------------------------------------------------------------
def losnet_fused_kernel(
    lens_ref,        # (bb, 1)  int32  sequence lengths
    x_ref,           # (tb, bb, I)     time-major input block
    wih_ref,         # (I, 4H)         gate order i,f,o,g
    whh_ref,         # (H, 4H)
    lstm_b_ref,      # (1, 4H)
    intv_ref,        # (bb, N)         note intervals
    emb_ref,         # (bb, N, E)      note pooler embeddings
    fc_wh_ref,       # (H, O_pad)      FC weight split at H (LN gamma folded in)
    fc_wz_ref,       # (E, O_pad)
    fc_b_ref,        # (1, O_pad)      FC bias (LN beta folded in)
    o_ref,           # (bb, O_pad)
    h_scr,           # (bb, H) scratch
    c_scr,           # (bb, H) scratch
    *, hidden, tb, feat_dim, log_base,
):
    t_blk = pl.program_id(1)

    @pl.when(t_blk == 0)
    def _():
        h_scr[...] = jnp.zeros_like(h_scr)
        c_scr[...] = jnp.zeros_like(c_scr)

    wih = wih_ref[...]
    whh = whh_ref[...]
    bias = lstm_b_ref[...]
    # remaining live steps for this time block; step s is live iff s < lens_rel
    lens_rel = lens_ref[...] - t_blk * tb                    # (bb, 1) int32

    def step(s, carry):
        h, c = carry
        x = x_ref[s]                                         # (bb, I)
        gates = (jnp.dot(x, wih, preferred_element_type=jnp.float32)
                 + jnp.dot(h, whh, preferred_element_type=jnp.float32)
                 + bias)                                     # (bb, 4H), order i,f,o,g
        sig = jax.nn.sigmoid(gates[:, :3 * hidden])          # one contiguous slice
        i_g = sig[:, 0 * hidden:1 * hidden]
        f_g = sig[:, 1 * hidden:2 * hidden]
        o_g = sig[:, 2 * hidden:3 * hidden]
        g_g = jnp.tanh(gates[:, 3 * hidden:4 * hidden])
        c_new = f_g * c + i_g * g_g
        h_new = o_g * jnp.tanh(c_new)
        live = s < lens_rel                                  # (bb, 1) bool
        h = jnp.where(live, h_new, h)
        c = jnp.where(live, c_new, c)
        return h, c

    h_fin, c_fin = jax.lax.fori_loop(
        0, tb, step, (h_scr[...], c_scr[...]), unroll=True)
    h_scr[...] = h_fin
    c_scr[...] = c_fin

    # ---- epilogue: weighted note sum + folded LayerNorm/Linear + ReLU ----
    @pl.when(t_blk == pl.num_programs(1) - 1)
    def _():
        h = h_fin                                                 # (bb, H)
        # (1 - decay)**interval == exp(interval * log(1 - decay)); decay in [0,1)
        w = jnp.exp(intv_ref[...] * jnp.float32(log_base))        # (bb, N)
        # VPU broadcast-multiply + sublane reduce over N (no M=1 MXU matmul)
        zt = jnp.sum(w[:, :, None] * emb_ref[...], axis=1)        # (bb, E)

        inv_d = jnp.float32(1.0 / feat_dim)
        mu = (jnp.sum(h, axis=-1, keepdims=True)
              + jnp.sum(zt, axis=-1, keepdims=True)) * inv_d
        dh = h - mu
        dz = zt - mu
        var = (jnp.sum(dh * dh, axis=-1, keepdims=True)
               + jnp.sum(dz * dz, axis=-1, keepdims=True)) * inv_d
        r = jax.lax.rsqrt(var + jnp.float32(1e-5))
        xh = dh * r                                               # (bb, H)
        xz = dz * r                                               # (bb, E)
        y = (jnp.dot(xh, fc_wh_ref[...], preferred_element_type=jnp.float32)
             + jnp.dot(xz, fc_wz_ref[...], preferred_element_type=jnp.float32)
             + fc_b_ref[...])                                     # (bb, O_pad)
        o_ref[...] = jnp.maximum(y, 0.0)


# ----------------------------------------------------------------------------
# Wrapper: whole LOSNetWeighted forward in one pallas_call
# ----------------------------------------------------------------------------
def losnet_forward(params, dynamic_x, lengths, note_emb, note_intervals, *,
                   hidden, out_features, decay_factor, time_block=32):
    # Guard: weights use exp(interval * log(1-decay)); decay must be in [0, 1).
    assert 0.0 <= decay_factor < 1.0, "decay_factor must be in [0, 1)"

    B, T, I = dynamic_x.shape
    _, N, E = note_emb.shape
    H = hidden
    o_pad = params["fc_b_p"].shape[1]

    # time-major; pad T up to a multiple of the time block (padded steps are
    # masked out by the in-kernel length mask, so the state stays frozen)
    tb = T if T <= time_block else time_block
    t_pad = _round_up(T, tb)
    x_tm = jnp.transpose(dynamic_x, (1, 0, 2))                    # (T, B, I)
    if t_pad != T:
        x_tm = jnp.pad(x_tm, ((0, t_pad - T), (0, 0), (0, 0)))
    nt = t_pad // tb

    # batch blocking: only split if each block stays >= 8 sublanes (megacore
    # parallel axis); with small B this degenerates to nb = 1.
    bb = B // 2 if (B % 16 == 0) else B
    nb = B // bb

    lens_i = lengths.astype(jnp.int32).reshape(B, 1)
    intervals = note_intervals.astype(jnp.float32)
    log_base = math.log1p(-decay_factor)                          # log(1-decay)

    kernel = functools.partial(
        losnet_fused_kernel, hidden=H, tb=tb, feat_dim=H + E, log_base=log_base)

    out = pl.pallas_call(
        kernel,
        out_shape=jax.ShapeDtypeStruct((B, o_pad), jnp.float32),
        grid_spec=pltpu.PrefetchScalarGridSpec(
            num_scalar_prefetch=0,
            grid=(nb, nt),
            in_specs=[
                pl.BlockSpec((bb, 1), lambda b, t: (b, 0)),          # lengths
                pl.BlockSpec((tb, bb, I), lambda b, t: (t, b, 0)),   # x (time blocked)
                pl.BlockSpec((I, 4 * H), lambda b, t: (0, 0)),       # wih_t
                pl.BlockSpec((H, 4 * H), lambda b, t: (0, 0)),       # whh_t
                pl.BlockSpec((1, 4 * H), lambda b, t: (0, 0)),       # lstm bias
                pl.BlockSpec((bb, N), lambda b, t: (b, 0)),          # intervals
                pl.BlockSpec((bb, N, E), lambda b, t: (b, 0, 0)),    # note emb
                pl.BlockSpec((H, o_pad), lambda b, t: (0, 0)),       # fc W[:H] (g-folded)
                pl.BlockSpec((E, o_pad), lambda b, t: (0, 0)),       # fc W[H:] (g-folded)
                pl.BlockSpec((1, o_pad), lambda b, t: (0, 0)),       # fc bias (b-folded)
            ],
            out_specs=pl.BlockSpec((bb, o_pad), lambda b, t: (b, 0)),
            scratch_shapes=[pltpu.VMEM((bb, H), jnp.float32),
                            pltpu.VMEM((bb, H), jnp.float32)],
        ),
        compiler_params=pltpu.CompilerParams(
            dimension_semantics=("parallel", "arbitrary")),
    )(lens_i, x_tm, params["wih_t"], params["whh_t"], params["lstm_b"],
      intervals, note_emb,
      params["fc_wh_p"], params["fc_wz_p"], params["fc_b_p"])

    return out[:, :out_features]


# ----------------------------------------------------------------------------
# Parameter packing (PyTorch layout -> kernel layout)
# ----------------------------------------------------------------------------
def pack_params(wih, whh, b_ih, b_hh, ln_g, ln_b, fc_w, fc_b,
                hidden, emb_dim, out_features):
    H = hidden

    def reorder(w):   # leading dim 4H: PyTorch (i,f,g,o) -> kernel (i,f,o,g)
        return jnp.concatenate(
            [w[0:H], w[H:2 * H], w[3 * H:4 * H], w[2 * H:3 * H]], axis=0)

    o_pad = _round_up(out_features, 128)
    # Fold LayerNorm affine into the FC layer (exact in real arithmetic):
    #   ((x-mu)*r*g + b) @ W.T + fb == ((x-mu)*r) @ (g[:,None]*W.T) + (b@W.T + fb)
    fc_w_t = ln_g[:, None] * fc_w.T                               # (D, OUT)
    fc_b_f = ln_b @ fc_w.T + fc_b                                 # (OUT,)
    fc_w_p = jnp.pad(fc_w_t, ((0, 0), (0, o_pad - out_features))) # (D, O_pad)
    fc_b_p = jnp.pad(fc_b_f, (0, o_pad - out_features)).reshape(1, o_pad)

    return {
        "wih_t": reorder(wih).T,                                  # (I, 4H)
        "whh_t": reorder(whh).T,                                  # (H, 4H)
        "lstm_b": reorder(b_ih + b_hh).reshape(1, 4 * H),
        "fc_wh_p": fc_w_p[:H],                                    # (H, O_pad)
        "fc_wz_p": fc_w_p[H:],                                    # (E, O_pad)
        "fc_b_p": fc_b_p,                                         # (1, O_pad)
    }


# ----------------------------------------------------------------------------
# Pure-JAX reference (PyTorch semantics, original gate order / layouts,
# LayerNorm affine NOT folded — so the fold is actually verified)
# ----------------------------------------------------------------------------
def losnet_reference(wih, whh, b_ih, b_hh, ln_g, ln_b, fc_w, fc_b,
                     dynamic_x, lengths, note_emb, note_intervals,
                     hidden, decay_factor):
    B, T, _ = dynamic_x.shape
    h = jnp.zeros((B, hidden), jnp.float32)
    c = jnp.zeros((B, hidden), jnp.float32)
    wih_t, whh_t, b = wih.T, whh.T, (b_ih + b_hh)[None, :]
    for t in range(T):
        x = dynamic_x[:, t, :]
        gates = x @ wih_t + h @ whh_t + b
        i_g = jax.nn.sigmoid(gates[:, 0 * hidden:1 * hidden])
        f_g = jax.nn.sigmoid(gates[:, 1 * hidden:2 * hidden])
        g_g = jnp.tanh(gates[:, 2 * hidden:3 * hidden])
        o_g = jax.nn.sigmoid(gates[:, 3 * hidden:4 * hidden])
        c_new = f_g * c + i_g * g_g
        h_new = o_g * jnp.tanh(c_new)
        m = (t < lengths).astype(jnp.float32)[:, None]
        h = m * h_new + (1.0 - m) * h
        c = m * c_new + (1.0 - m) * c
    weights = (1.0 - decay_factor) ** note_intervals              # (B, N)
    zt = jnp.einsum("bn,bne->be", weights, note_emb)
    x = jnp.concatenate([h, zt], axis=1)
    mu = jnp.mean(x, axis=-1, keepdims=True)
    var = jnp.mean(jnp.square(x - mu), axis=-1, keepdims=True)
    xn = (x - mu) / jnp.sqrt(var + 1e-5) * ln_g + ln_b
    return jnp.maximum(xn @ fc_w.T + fc_b, 0.0)


if __name__ == "__main__":
    # Small shapes consistent with the module's forward
    B, T, I = 2, 8, 8            # batch, time steps, input_size
    H = 32                       # hidden_size
    N, E = 4, 768                # notes per patient, BERT pooler dim
    OUT = 8                      # out_features
    DECAY = 0.1

    key = jax.random.PRNGKey(0)
    keys = jax.random.split(key, 12)

    # PyTorch-style uniform(-1/sqrt(H), 1/sqrt(H)) init, PyTorch gate order
    k_lstm = 1.0 / math.sqrt(H)
    wih = jax.random.uniform(keys[0], (4 * H, I), jnp.float32, -k_lstm, k_lstm)
    whh = jax.random.uniform(keys[1], (4 * H, H), jnp.float32, -k_lstm, k_lstm)
    b_ih = jax.random.uniform(keys[2], (4 * H,), jnp.float32, -k_lstm, k_lstm)
    b_hh = jax.random.uniform(keys[3], (4 * H,), jnp.float32, -k_lstm, k_lstm)

    D = H + E
    k_fc = 1.0 / math.sqrt(D)
    fc_w = jax.random.uniform(keys[4], (OUT, D), jnp.float32, -k_fc, k_fc)
    fc_b = jax.random.uniform(keys[5], (OUT,), jnp.float32, -k_fc, k_fc)
    # non-trivial LayerNorm affine so the pack-time fold is actually exercised
    ln_g = 1.0 + 0.1 * jax.random.normal(keys[9], (D,), jnp.float32)
    ln_b = 0.1 * jax.random.normal(keys[10], (D,), jnp.float32)

    params = pack_params(wih, whh, b_ih, b_hh, ln_g, ln_b, fc_w, fc_b, H, E, OUT)

    # Deterministic example inputs
    dynamic_x = jax.random.normal(keys[6], (B, T, I), jnp.float32)
    lengths = jnp.array([T, T - 3], dtype=jnp.int32)        # padded-seq lengths
    note_emb = jax.random.normal(keys[7], (B, N, E), jnp.float32)  # pooler_output
    note_intervals = jax.random.uniform(keys[8], (B, N), jnp.float32, 0.0, 10.0)

    fwd = jax.jit(functools.partial(
        losnet_forward, hidden=H, out_features=OUT, decay_factor=DECAY))
    y = fwd(params, dynamic_x, lengths, note_emb, note_intervals)
    jax.block_until_ready(y)

    y_ref = losnet_reference(wih, whh, b_ih, b_hh, ln_g, ln_b, fc_w, fc_b,
                             dynamic_x, lengths, note_emb, note_intervals,
                             H, DECAY)
    np.testing.assert_allclose(np.asarray(y), np.asarray(y_ref),
                               rtol=1e-4, atol=1e-4)

    print("KERNEL_OK")
</pallas_src>

<mosaic_0001>
module attributes {stable_mosaic.version = 11 : i64} {
  func.func @losnet_fused_kernel(%arg0: i32, %arg1: i32, %arg2: memref<2x1xi32, #tpu.memory_space<vmem>>, %arg3: memref<8x2x8xf32, #tpu.memory_space<vmem>>, %arg4: memref<8x128xf32, #tpu.memory_space<vmem>>, %arg5: memref<32x128xf32, #tpu.memory_space<vmem>>, %arg6: memref<1x128xf32, #tpu.memory_space<vmem>>, %arg7: memref<2x4xf32, #tpu.memory_space<vmem>>, %arg8: memref<2x4x768xf32, #tpu.memory_space<vmem>>, %arg9: memref<32x128xf32, #tpu.memory_space<vmem>>, %arg10: memref<768x128xf32, #tpu.memory_space<vmem>>, %arg11: memref<1x128xf32, #tpu.memory_space<vmem>>, %arg12: memref<2x128xf32, #tpu.memory_space<vmem>>, %arg13: memref<2x32xf32, #tpu.memory_space<vmem>>, %arg14: memref<2x32xf32, #tpu.memory_space<vmem>>) attributes {dimension_semantics = [#tpu.dimension_semantics<parallel>, #tpu.dimension_semantics<arbitrary>], iteration_bounds = array<i64: 1, 1>, scalar_prefetch = 0 : i64, scratch_operands = 2 : i64, tpu.core_type = #tpu.core_type<tc>, window_params = [{transform_indices = @transform_0, window_bounds = array<i64: 2, 1>}, {transform_indices = @transform_1, window_bounds = array<i64: 8, 2, 8>}, {pipeline_mode = #tpu.pipeline_mode<synchronous>, transform_indices = @transform_2, window_bounds = array<i64: 8, 128>}, {pipeline_mode = #tpu.pipeline_mode<synchronous>, transform_indices = @transform_3, window_bounds = array<i64: 32, 128>}, {pipeline_mode = #tpu.pipeline_mode<synchronous>, transform_indices = @transform_4, window_bounds = array<i64: 1, 128>}, {transform_indices = @transform_5, window_bounds = array<i64: 2, 4>}, {transform_indices = @transform_6, window_bounds = array<i64: 2, 4, 768>}, {pipeline_mode = #tpu.pipeline_mode<synchronous>, transform_indices = @transform_7, window_bounds = array<i64: 32, 128>}, {pipeline_mode = #tpu.pipeline_mode<synchronous>, transform_indices = @transform_8, window_bounds = array<i64: 768, 128>}, {pipeline_mode = #tpu.pipeline_mode<synchronous>, transform_indices = @transform_9, window_bounds = array<i64: 1, 128>}, {transform_indices = @transform_10, window_bounds = array<i64: 2, 128>}]} {
    %c0_i32 = arith.constant 0 : i32
    %0 = arith.cmpi eq, %arg1, %c0_i32 : i32
    %1 = arith.extui %0 : i1 to i32
    %c0_i32_0 = arith.constant 0 : i32
    %2 = arith.cmpi ne, %1, %c0_i32_0 : i32
    scf.if %2 {
      %cst_59 = arith.constant 0.000000e+00 : f32
      %273 = vector.broadcast %cst_59 : f32 to vector<2x32xf32>
      %c0_60 = arith.constant 0 : index
      %c0_61 = arith.constant 0 : index
      %274 = vector.load %arg13[%c0_60, %c0_61] : memref<2x32xf32, #tpu.memory_space<vmem>>, vector<2x32xf32>
      tpu.vector_store %arg13[%c0_60, %c0_61], %273 {strides = array<i32>} : memref<2x32xf32, #tpu.memory_space<vmem>>, vector<2x32xf32>,
      %cst_62 = arith.constant 0.000000e+00 : f32
      %275 = vector.broadcast %cst_62 : f32 to vector<2x32xf32>
      %c0_63 = arith.constant 0 : index
      %c0_64 = arith.constant 0 : index
      %276 = vector.load %arg14[%c0_63, %c0_64] : memref<2x32xf32, #tpu.memory_space<vmem>>, vector<2x32xf32>
      tpu.vector_store %arg14[%c0_63, %c0_64], %275 {strides = array<i32>} : memref<2x32xf32, #tpu.memory_space<vmem>>, vector<2x32xf32>,
    } else {
    }
    %c0 = arith.constant 0 : index
    %c0_1 = arith.constant 0 : index
    %3 = vector.load %arg4[%c0, %c0_1] : memref<8x128xf32, #tpu.memory_space<vmem>>, vector<8x128xf32>
    %c0_2 = arith.constant 0 : index
    %c0_3 = arith.constant 0 : index
    %4 = vector.load %arg5[%c0_2, %c0_3] : memref<32x128xf32, #tpu.memory_space<vmem>>, vector<32x128xf32>
    %c0_4 = arith.constant 0 : index
    %c0_5 = arith.constant 0 : index
    %5 = vector.load %arg6[%c0_4, %c0_5] : memref<1x128xf32, #tpu.memory_space<vmem>>, vector<1x128xf32>
    %c0_6 = arith.constant 0 : index
    %c0_7 = arith.constant 0 : index
    %6 = vector.load %arg2[%c0_6, %c0_7] : memref<2x1xi32, #tpu.memory_space<vmem>>, vector<2x1xi32>
    %c8_i32 = arith.constant 8 : i32
    %7 = arith.muli %arg1, %c8_i32 : i32
    %8 = vector.broadcast %7 : i32 to vector<2x1xi32>
    %9 = arith.subi %6, %8 : vector<2x1xi32>
    %c0_8 = arith.constant 0 : index
    %c0_9 = arith.constant 0 : index
    %10 = vector.load %arg13[%c0_8, %c0_9] : memref<2x32xf32, #tpu.memory_space<vmem>>, vector<2x32xf32>
    %c0_10 = arith.constant 0 : index
    %c0_11 = arith.constant 0 : index
    %11 = vector.load %arg14[%c0_10, %c0_11] : memref<2x32xf32, #tpu.memory_space<vmem>>, vector<2x32xf32>
    %c0_i32_12 = arith.constant 0 : i32
    %12 = arith.index_cast %c0_i32_12 : i32 to index
    %c0_13 = arith.constant 0 : index
    %c0_14 = arith.constant 0 : index
    %13 = vector.load %arg3[%12, %c0_13, %c0_14] : memref<8x2x8xf32, #tpu.memory_space<vmem>>, vector<1x2x8xf32>
    %14 = vector.shape_cast %13 : vector<1x2x8xf32> to vector<2x8xf32>
    %cst = arith.constant dense<0.000000e+00> : vector<2x128xf32>
    %15 = tpu.matmul %14, %3, %cst {dimension_numbers = #tpu.dot_dimension_numbers<[1], [0], [0], [1], [0, 0, 1, 1], [], []>} : vector<2x8xf32>, vector<8x128xf32>, vector<2x128xf32> -> vector<2x128xf32>
    %cst_15 = arith.constant dense<0.000000e+00> : vector<2x128xf32>
    %16 = tpu.matmul %10, %4, %cst_15 {dimension_numbers = #tpu.dot_dimension_numbers<[1], [0], [0], [1], [0, 0, 1, 1], [], []>} : vector<2x32xf32>, vector<32x128xf32>, vector<2x128xf32> -> vector<2x128xf32>
    %17 = arith.addf %15, %16 : vector<2x128xf32>
    %18 = vector.broadcast %5 : vector<1x128xf32> to vector<2x128xf32>
    %19 = arith.addf %17, %18 : vector<2x128xf32>
    %20 = vector.extract_strided_slice %19 {offsets = [0, 0], sizes = [2, 96], strides = [1, 1]} : vector<2x128xf32> to vector<2x96xf32>
    %21 = arith.negf %20 : vector<2x96xf32>
    %22 = math.exp %21 : vector<2x96xf32>
    %cst_16 = arith.constant 1.000000e+00 : f32
    %23 = vector.broadcast %cst_16 : f32 to vector<2x96xf32>
    %24 = arith.addf %23, %22 : vector<2x96xf32>
    %25 = arith.divf %23, %24 : vector<2x96xf32>
    %26 = vector.extract_strided_slice %25 {offsets = [0, 0], sizes = [2, 32], strides = [1, 1]} : vector<2x96xf32> to vector<2x32xf32>
    %27 = vector.extract_strided_slice %25 {offsets = [0, 32], sizes = [2, 32], strides = [1, 1]} : vector<2x96xf32> to vector<2x32xf32>
    %28 = vector.extract_strided_slice %25 {offsets = [0, 64], sizes = [2, 32], strides = [1, 1]} : vector<2x96xf32> to vector<2x32xf32>
    %29 = vector.extract_strided_slice %19 {offsets = [0, 96], sizes = [2, 32], strides = [1, 1]} : vector<2x128xf32> to vector<2x32xf32>
    %30 = math.tanh %29 : vector<2x32xf32>
    %31 = arith.mulf %27, %11 : vector<2x32xf32>
    %32 = arith.mulf %26, %30 : vector<2x32xf32>
    %33 = arith.addf %31, %32 : vector<2x32xf32>
    %34 = math.tanh %33 : vector<2x32xf32>
    %35 = arith.mulf %28, %34 : vector<2x32xf32>
    %36 = vector.broadcast %c0_i32_12 : i32 to vector<2x1xi32>
    %37 = arith.cmpi slt, %36, %9 : vector<2x1xi32>
    %38 = vector.shape_cast %37 : vector<2x1xi1> to vector<2x1xi1>
    %39 = vector.broadcast %38 : vector<2x1xi1> to vector<2x32xi1>
    %40 = arith.select %39, %35, %10 : vector<2x32xi1>, vector<2x32xf32>
    %41 = vector.shape_cast %37 : vector<2x1xi1> to vector<2x1xi1>
    %42 = vector.broadcast %41 : vector<2x1xi1> to vector<2x32xi1>
    %43 = arith.select %42, %33, %11 : vector<2x32xi1>, vector<2x32xf32>
    %c1_i32 = arith.constant 1 : i32
    %44 = arith.index_cast %c1_i32 : i32 to index
    %c0_17 = arith.constant 0 : index
    %c0_18 = arith.constant 0 : index
    %45 = vector.load %arg3[%44, %c0_17, %c0_18] : memref<8x2x8xf32, #tpu.memory_space<vmem>>, vector<1x2x8xf32>
    %46 = vector.shape_cast %45 : vector<1x2x8xf32> to vector<2x8xf32>
    %cst_19 = arith.constant dense<0.000000e+00> : vector<2x128xf32>
    %47 = tpu.matmul %46, %3, %cst_19 {dimension_numbers = #tpu.dot_dimension_numbers<[1], [0], [0], [1], [0, 0, 1, 1], [], []>} : vector<2x8xf32>, vector<8x128xf32>, vector<2x128xf32> -> vector<2x128xf32>
    %cst_20 = arith.constant dense<0.000000e+00> : vector<2x128xf32>
    %48 = tpu.matmul %40, %4, %cst_20 {dimension_numbers = #tpu.dot_dimension_numbers<[1], [0], [0], [1], [0, 0, 1, 1], [], []>} : vector<2x32xf32>, vector<32x128xf32>, vector<2x128xf32> -> vector<2x128xf32>
    %49 = arith.addf %47, %48 : vector<2x128xf32>
    %50 = vector.broadcast %5 : vector<1x128xf32> to vector<2x128xf32>
    %51 = arith.addf %49, %50 : vector<2x128xf32>
    %52 = vector.extract_strided_slice %51 {offsets = [0, 0], sizes = [2, 96], strides = [1, 1]} : vector<2x128xf32> to vector<2x96xf32>
    %53 = arith.negf %52 : vector<2x96xf32>
    %54 = math.exp %53 : vector<2x96xf32>
    %cst_21 = arith.constant 1.000000e+00 : f32
    %55 = vector.broadcast %cst_21 : f32 to vector<2x96xf32>
    %56 = arith.addf %55, %54 : vector<2x96xf32>
    %57 = arith.divf %55, %56 : vector<2x96xf32>
    %58 = vector.extract_strided_slice %57 {offsets = [0, 0], sizes = [2, 32], strides = [1, 1]} : vector<2x96xf32> to vector<2x32xf32>
    %59 = vector.extract_strided_slice %57 {offsets = [0, 32], sizes = [2, 32], strides = [1, 1]} : vector<2x96xf32> to vector<2x32xf32>
    %60 = vector.extract_strided_slice %57 {offsets = [0, 64], sizes = [2, 32], strides = [1, 1]} : vector<2x96xf32> to vector<2x32xf32>
    %61 = vector.extract_strided_slice %51 {offsets = [0, 96], sizes = [2, 32], strides = [1, 1]} : vector<2x128xf32> to vector<2x32xf32>
    %62 = math.tanh %61 : vector<2x32xf32>
    %63 = arith.mulf %59, %43 : vector<2x32xf32>
    %64 = arith.mulf %58, %62 : vector<2x32xf32>
    %65 = arith.addf %63, %64 : vector<2x32xf32>
    %66 = math.tanh %65 : vector<2x32xf32>
    %67 = arith.mulf %60, %66 : vector<2x32xf32>
    %68 = vector.broadcast %c1_i32 : i32 to vector<2x1xi32>
    %69 = arith.cmpi slt, %68, %9 : vector<2x1xi32>
    %70 = vector.shape_cast %69 : vector<2x1xi1> to vector<2x1xi1>
    %71 = vector.broadcast %70 : vector<2x1xi1> to vector<2x32xi1>
    %72 = arith.select %71, %67, %40 : vector<2x32xi1>, vector<2x32xf32>
    %73 = vector.shape_cast %69 : vector<2x1xi1> to vector<2x1xi1>
    %74 = vector.broadcast %73 : vector<2x1xi1> to vector<2x32xi1>
    %75 = arith.select %74, %65, %43 : vector<2x32xi1>, vector<2x32xf32>
    %c2_i32 = arith.constant 2 : i32
    %76 = arith.index_cast %c2_i32 : i32 to index
    %c0_22 = arith.constant 0 : index
    %c0_23 = arith.constant 0 : index
    %77 = vector.load %arg3[%76, %c0_22, %c0_23] : memref<8x2x8xf32, #tpu.memory_space<vmem>>, vector<1x2x8xf32>
    %78 = vector.shape_cast %77 : vector<1x2x8xf32> to vector<2x8xf32>
    %cst_24 = arith.constant dense<0.000000e+00> : vector<2x128xf32>
    %79 = tpu.matmul %78, %3, %cst_24 {dimension_numbers = #tpu.dot_dimension_numbers<[1], [0], [0], [1], [0, 0, 1, 1], [], []>} : vector<2x8xf32>, vector<8x128xf32>, vector<2x128xf32> -> vector<2x128xf32>
    %cst_25 = arith.constant dense<0.000000e+00> : vector<2x128xf32>
    %80 = tpu.matmul %72, %4, %cst_25 {dimension_numbers = #tpu.dot_dimension_numbers<[1], [0], [0], [1], [0, 0, 1, 1], [], []>} : vector<2x32xf32>, vector<32x128xf32>, vector<2x128xf32> -> vector<2x128xf32>
    %81 = arith.addf %79, %80 : vector<2x128xf32>
    %82 = vector.broadcast %5 : vector<1x128xf32> to vector<2x128xf32>
    %83 = arith.addf %81, %82 : vector<2x128xf32>
    %84 = vector.extract_strided_slice %83 {offsets = [0, 0], sizes = [2, 96], strides = [1, 1]} : vector<2x128xf32> to vector<2x96xf32>
    %85 = arith.negf %84 : vector<2x96xf32>
    %86 = math.exp %85 : vector<2x96xf32>
    %cst_26 = arith.constant 1.000000e+00 : f32
    %87 = vector.broadcast %cst_26 : f32 to vector<2x96xf32>
    %88 = arith.addf %87, %86 : vector<2x96xf32>
    %89 = arith.divf %87, %88 : vector<2x96xf32>
    %90 = vector.extract_strided_slice %89 {offsets = [0, 0], sizes = [2, 32], strides = [1, 1]} : vector<2x96xf32> to vector<2x32xf32>
    %91 = vector.extract_strided_slice %89 {offsets = [0, 32], sizes = [2, 32], strides = [1, 1]} : vector<2x96xf32> to vector<2x32xf32>
    %92 = vector.extract_strided_slice %89 {offsets = [0, 64], sizes = [2, 32], strides = [1, 1]} : vector<2x96xf32> to vector<2x32xf32>
    %93 = vector.extract_strided_slice %83 {offsets = [0, 96], sizes = [2, 32], strides = [1, 1]} : vector<2x128xf32> to vector<2x32xf32>
    %94 = math.tanh %93 : vector<2x32xf32>
    %95 = arith.mulf %91, %75 : vector<2x32xf32>
    %96 = arith.mulf %90, %94 : vector<2x32xf32>
    %97 = arith.addf %95, %96 : vector<2x32xf32>
    %98 = math.tanh %97 : vector<2x32xf32>
    %99 = arith.mulf %92, %98 : vector<2x32xf32>
    %100 = vector.broadcast %c2_i32 : i32 to vector<2x1xi32>
    %101 = arith.cmpi slt, %100, %9 : vector<2x1xi32>
    %102 = vector.shape_cast %101 : vector<2x1xi1> to vector<2x1xi1>
    %103 = vector.broadcast %102 : vector<2x1xi1> to vector<2x32xi1>
    %104 = arith.select %103, %99, %72 : vector<2x32xi1>, vector<2x32xf32>
    %105 = vector.shape_cast %101 : vector<2x1xi1> to vector<2x1xi1>
    %106 = vector.broadcast %105 : vector<2x1xi1> to vector<2x32xi1>
    %107 = arith.select %106, %97, %75 : vector<2x32xi1>, vector<2x32xf32>
    %c3_i32 = arith.constant 3 : i32
    %108 = arith.index_cast %c3_i32 : i32 to index
    %c0_27 = arith.constant 0 : index
    %c0_28 = arith.constant 0 : index
    %109 = vector.load %arg3[%108, %c0_27, %c0_28] : memref<8x2x8xf32, #tpu.memory_space<vmem>>, vector<1x2x8xf32>
    %110 = vector.shape_cast %109 : vector<1x2x8xf32> to vector<2x8xf32>
    %cst_29 = arith.constant dense<0.000000e+00> : vector<2x128xf32>
    %111 = tpu.matmul %110, %3, %cst_29 {dimension_numbers = #tpu.dot_dimension_numbers<[1], [0], [0], [1], [0, 0, 1, 1], [], []>} : vector<2x8xf32>, vector<8x128xf32>, vector<2x128xf32> -> vector<2x128xf32>
    %cst_30 = arith.constant dense<0.000000e+00> : vector<2x128xf32>
    %112 = tpu.matmul %104, %4, %cst_30 {dimension_numbers = #tpu.dot_dimension_numbers<[1], [0], [0], [1], [0, 0, 1, 1], [], []>} : vector<2x32xf32>, vector<32x128xf32>, vector<2x128xf32> -> vector<2x128xf32>
    %113 = arith.addf %111, %112 : vector<2x128xf32>
    %114 = vector.broadcast %5 : vector<1x128xf32> to vector<2x128xf32>
    %115 = arith.addf %113, %114 : vector<2x128xf32>
    %116 = vector.extract_strided_slice %115 {offsets = [0, 0], sizes = [2, 96], strides = [1, 1]} : vector<2x128xf32> to vector<2x96xf32>
    %117 = arith.negf %116 : vector<2x96xf32>
    %118 = math.exp %117 : vector<2x96xf32>
    %cst_31 = arith.constant 1.000000e+00 : f32
    %119 = vector.broadcast %cst_31 : f32 to vector<2x96xf32>
    %120 = arith.addf %119, %118 : vector<2x96xf32>
    %121 = arith.divf %119, %120 : vector<2x96xf32>
    %122 = vector.extract_strided_slice %121 {offsets = [0, 0], sizes = [2, 32], strides = [1, 1]} : vector<2x96xf32> to vector<2x32xf32>
    %123 = vector.extract_strided_slice %121 {offsets = [0, 32], sizes = [2, 32], strides = [1, 1]} : vector<2x96xf32> to vector<2x32xf32>
    %124 = vector.extract_strided_slice %121 {offsets = [0, 64], sizes = [2, 32], strides = [1, 1]} : vector<2x96xf32> to vector<2x32xf32>
    %125 = vector.extract_strided_slice %115 {offsets = [0, 96], sizes = [2, 32], strides = [1, 1]} : vector<2x128xf32> to vector<2x32xf32>
    %126 = math.tanh %125 : vector<2x32xf32>
    %127 = arith.mulf %123, %107 : vector<2x32xf32>
    %128 = arith.mulf %122, %126 : vector<2x32xf32>
    %129 = arith.addf %127, %128 : vector<2x32xf32>
    %130 = math.tanh %129 : vector<2x32xf32>
    %131 = arith.mulf %124, %130 : vector<2x32xf32>
    %132 = vector.broadcast %c3_i32 : i32 to vector<2x1xi32>
    %133 = arith.cmpi slt, %132, %9 : vector<2x1xi32>
    %134 = vector.shape_cast %133 : vector<2x1xi1> to vector<2x1xi1>
    %135 = vector.broadcast %134 : vector<2x1xi1> to vector<2x32xi1>
    %136 = arith.select %135, %131, %104 : vector<2x32xi1>, vector<2x32xf32>
    %137 = vector.shape_cast %133 : vector<2x1xi1> to vector<2x1xi1>
    %138 = vector.broadcast %137 : vector<2x1xi1> to vector<2x32xi1>
    %139 = arith.select %138, %129, %107 : vector<2x32xi1>, vector<2x32xf32>
    %c4_i32 = arith.constant 4 : i32
    %140 = arith.index_cast %c4_i32 : i32 to index
    %c0_32 = arith.constant 0 : index
    %c0_33 = arith.constant 0 : index
    %141 = vector.load %arg3[%140, %c0_32, %c0_33] : memref<8x2x8xf32, #tpu.memory_space<vmem>>, vector<1x2x8xf32>
    %142 = vector.shape_cast %141 : vector<1x2x8xf32> to vector<2x8xf32>
    %cst_34 = arith.constant dense<0.000000e+00> : vector<2x128xf32>
    %143 = tpu.matmul %142, %3, %cst_34 {dimension_numbers = #tpu.dot_dimension_numbers<[1], [0], [0], [1], [0, 0, 1, 1], [], []>} : vector<2x8xf32>, vector<8x128xf32>, vector<2x128xf32> -> vector<2x128xf32>
    %cst_35 = arith.constant dense<0.000000e+00> : vector<2x128xf32>
    %144 = tpu.matmul %136, %4, %cst_35 {dimension_numbers = #tpu.dot_dimension_numbers<[1], [0], [0], [1], [0, 0, 1, 1], [], []>} : vector<2x32xf32>, vector<32x128xf32>, vector<2x128xf32> -> vector<2x128xf32>
    %145 = arith.addf %143, %144 : vector<2x128xf32>
    %146 = vector.broadcast %5 : vector<1x128xf32> to vector<2x128xf32>
    %147 = arith.addf %145, %146 : vector<2x128xf32>
    %148 = vector.extract_strided_slice %147 {offsets = [0, 0], sizes = [2, 96], strides = [1, 1]} : vector<2x128xf32> to vector<2x96xf32>
    %149 = arith.negf %148 : vector<2x96xf32>
    %150 = math.exp %149 : vector<2x96xf32>
    %cst_36 = arith.constant 1.000000e+00 : f32
    %151 = vector.broadcast %cst_36 : f32 to vector<2x96xf32>
    %152 = arith.addf %151, %150 : vector<2x96xf32>
    %153 = arith.divf %151, %152 : vector<2x96xf32>
    %154 = vector.extract_strided_slice %153 {offsets = [0, 0], sizes = [2, 32], strides = [1, 1]} : vector<2x96xf32> to vector<2x32xf32>
    %155 = vector.extract_strided_slice %153 {offsets = [0, 32], sizes = [2, 32], strides = [1, 1]} : vector<2x96xf32> to vector<2x32xf32>
    %156 = vector.extract_strided_slice %153 {offsets = [0, 64], sizes = [2, 32], strides = [1, 1]} : vector<2x96xf32> to vector<2x32xf32>
    %157 = vector.extract_strided_slice %147 {offsets = [0, 96], sizes = [2, 32], strides = [1, 1]} : vector<2x128xf32> to vector<2x32xf32>
    %158 = math.tanh %157 : vector<2x32xf32>
    %159 = arith.mulf %155, %139 : vector<2x32xf32>
    %160 = arith.mulf %154, %158 : vector<2x32xf32>
    %161 = arith.addf %159, %160 : vector<2x32xf32>
    %162 = math.tanh %161 : vector<2x32xf32>
    %163 = arith.mulf %156, %162 : vector<2x32xf32>
    %164 = vector.broadcast %c4_i32 : i32 to vector<2x1xi32>
    %165 = arith.cmpi slt, %164, %9 : vector<2x1xi32>
    %166 = vector.shape_cast %165 : vector<2x1xi1> to vector<2x1xi1>
    %167 = vector.broadcast %166 : vector<2x1xi1> to vector<2x32xi1>
    %168 = arith.select %167, %163, %136 : vector<2x32xi1>, vector<2x32xf32>
    %169 = vector.shape_cast %165 : vector<2x1xi1> to vector<2x1xi1>
    %170 = vector.broadcast %169 : vector<2x1xi1> to vector<2x32xi1>
    %171 = arith.select %170, %161, %139 : vector<2x32xi1>, vector<2x32xf32>
    %c5_i32 = arith.constant 5 : i32
    %172 = arith.index_cast %c5_i32 : i32 to index
    %c0_37 = arith.constant 0 : index
    %c0_38 = arith.constant 0 : index
    %173 = vector.load %arg3[%172, %c0_37, %c0_38] : memref<8x2x8xf32, #tpu.memory_space<vmem>>, vector<1x2x8xf32>
    %174 = vector.shape_cast %173 : vector<1x2x8xf32> to vector<2x8xf32>
    %cst_39 = arith.constant dense<0.000000e+00> : vector<2x128xf32>
    %175 = tpu.matmul %174, %3, %cst_39 {dimension_numbers = #tpu.dot_dimension_numbers<[1], [0], [0], [1], [0, 0, 1, 1], [], []>} : vector<2x8xf32>, vector<8x128xf32>, vector<2x128xf32> -> vector<2x128xf32>
    %cst_40 = arith.constant dense<0.000000e+00> : vector<2x128xf32>
    %176 = tpu.matmul %168, %4, %cst_40 {dimension_numbers = #tpu.dot_dimension_numbers<[1], [0], [0], [1], [0, 0, 1, 1], [], []>} : vector<2x32xf32>, vector<32x128xf32>, vector<2x128xf32> -> vector<2x128xf32>
    %177 = arith.addf %175, %176 : vector<2x128xf32>
    %178 = vector.broadcast %5 : vector<1x128xf32> to vector<2x128xf32>
    %179 = arith.addf %177, %178 : vector<2x128xf32>
    %180 = vector.extract_strided_slice %179 {offsets = [0, 0], sizes = [2, 96], strides = [1, 1]} : vector<2x128xf32> to vector<2x96xf32>
    %181 = arith.negf %180 : vector<2x96xf32>
    %182 = math.exp %181 : vector<2x96xf32>
    %cst_41 = arith.constant 1.000000e+00 : f32
    %183 = vector.broadcast %cst_41 : f32 to vector<2x96xf32>
    %184 = arith.addf %183, %182 : vector<2x96xf32>
    %185 = arith.divf %183, %184 : vector<2x96xf32>
    %186 = vector.extract_strided_slice %185 {offsets = [0, 0], sizes = [2, 32], strides = [1, 1]} : vector<2x96xf32> to vector<2x32xf32>
    %187 = vector.extract_strided_slice %185 {offsets = [0, 32], sizes = [2, 32], strides = [1, 1]} : vector<2x96xf32> to vector<2x32xf32>
    %188 = vector.extract_strided_slice %185 {offsets = [0, 64], sizes = [2, 32], strides = [1, 1]} : vector<2x96xf32> to vector<2x32xf32>
    %189 = vector.extract_strided_slice %179 {offsets = [0, 96], sizes = [2, 32], strides = [1, 1]} : vector<2x128xf32> to vector<2x32xf32>
    %190 = math.tanh %189 : vector<2x32xf32>
    %191 = arith.mulf %187, %171 : vector<2x32xf32>
    %192 = arith.mulf %186, %190 : vector<2x32xf32>
    %193 = arith.addf %191, %192 : vector<2x32xf32>
    %194 = math.tanh %193 : vector<2x32xf32>
    %195 = arith.mulf %188, %194 : vector<2x32xf32>
    %196 = vector.broadcast %c5_i32 : i32 to vector<2x1xi32>
    %197 = arith.cmpi slt, %196, %9 : vector<2x1xi32>
    %198 = vector.shape_cast %197 : vector<2x1xi1> to vector<2x1xi1>
    %199 = vector.broadcast %198 : vector<2x1xi1> to vector<2x32xi1>
    %200 = arith.select %199, %195, %168 : vector<2x32xi1>, vector<2x32xf32>
    %201 = vector.shape_cast %197 : vector<2x1xi1> to vector<2x1xi1>
    %202 = vector.broadcast %201 : vector<2x1xi1> to vector<2x32xi1>
    %203 = arith.select %202, %193, %171 : vector<2x32xi1>, vector<2x32xf32>
    %c6_i32 = arith.constant 6 : i32
    %204 = arith.index_cast %c6_i32 : i32 to index
    %c0_42 = arith.constant 0 : index
    %c0_43 = arith.constant 0 : index
    %205 = vector.load %arg3[%204, %c0_42, %c0_43] : memref<8x2x8xf32, #tpu.memory_space<vmem>>, vector<1x2x8xf32>
    %206 = vector.shape_cast %205 : vector<1x2x8xf32> to vector<2x8xf32>
    %cst_44 = arith.constant dense<0.000000e+00> : vector<2x128xf32>
    %207 = tpu.matmul %206, %3, %cst_44 {dimension_numbers = #tpu.dot_dimension_numbers<[1], [0], [0], [1], [0, 0, 1, 1], [], []>} : vector<2x8xf32>, vector<8x128xf32>, vector<2x128xf32> -> vector<2x128xf32>
    %cst_45 = arith.constant dense<0.000000e+00> : vector<2x128xf32>
    %208 = tpu.matmul %200, %4, %cst_45 {dimension_numbers = #tpu.dot_dimension_numbers<[1], [0], [0], [1], [0, 0, 1, 1], [], []>} : vector<2x32xf32>, vector<32x128xf32>, vector<2x128xf32> -> vector<2x128xf32>
    %209 = arith.addf %207, %208 : vector<2x128xf32>
    %210 = vector.broadcast %5 : vector<1x128xf32> to vector<2x128xf32>
    %211 = arith.addf %209, %210 : vector<2x128xf32>
    %212 = vector.extract_strided_slice %211 {offsets = [0, 0], sizes = [2, 96], strides = [1, 1]} : vector<2x128xf32> to vector<2x96xf32>
    %213 = arith.negf %212 : vector<2x96xf32>
    %214 = math.exp %213 : vector<2x96xf32>
    %cst_46 = arith.constant 1.000000e+00 : f32
    %215 = vector.broadcast %cst_46 : f32 to vector<2x96xf32>
    %216 = arith.addf %215, %214 : vector<2x96xf32>
    %217 = arith.divf %215, %216 : vector<2x96xf32>
    %218 = vector.extract_strided_slice %217 {offsets = [0, 0], sizes = [2, 32], strides = [1, 1]} : vector<2x96xf32> to vector<2x32xf32>
    %219 = vector.extract_strided_slice %217 {offsets = [0, 32], sizes = [2, 32], strides = [1, 1]} : vector<2x96xf32> to vector<2x32xf32>
    %220 = vector.extract_strided_slice %217 {offsets = [0, 64], sizes = [2, 32], strides = [1, 1]} : vector<2x96xf32> to vector<2x32xf32>
    %221 = vector.extract_strided_slice %211 {offsets = [0, 96], sizes = [2, 32], strides = [1, 1]} : vector<2x128xf32> to vector<2x32xf32>
    %222 = math.tanh %221 : vector<2x32xf32>
    %223 = arith.mulf %219, %203 : vector<2x32xf32>
    %224 = arith.mulf %218, %222 : vector<2x32xf32>
    %225 = arith.addf %223, %224 : vector<2x32xf32>
    %226 = math.tanh %225 : vector<2x32xf32>
    %227 = arith.mulf %220, %226 : vector<2x32xf32>
    %228 = vector.broadcast %c6_i32 : i32 to vector<2x1xi32>
    %229 = arith.cmpi slt, %228, %9 : vector<2x1xi32>
    %230 = vector.shape_cast %229 : vector<2x1xi1> to vector<2x1xi1>
    %231 = vector.broadcast %230 : vector<2x1xi1> to vector<2x32xi1>
    %232 = arith.select %231, %227, %200 : vector<2x32xi1>, vector<2x32xf32>
    %233 = vector.shape_cast %229 : vector<2x1xi1> to vector<2x1xi1>
    %234 = vector.broadcast %233 : vector<2x1xi1> to vector<2x32xi1>
    %235 = arith.select %234, %225, %203 : vector<2x32xi1>, vector<2x32xf32>
    %c7_i32 = arith.constant 7 : i32
    %236 = arith.index_cast %c7_i32 : i32 to index
    %c0_47 = arith.constant 0 : index
    %c0_48 = arith.constant 0 : index
    %237 = vector.load %arg3[%236, %c0_47, %c0_48] : memref<8x2x8xf32, #tpu.memory_space<vmem>>, vector<1x2x8xf32>
    %238 = vector.shape_cast %237 : vector<1x2x8xf32> to vector<2x8xf32>
    %cst_49 = arith.constant dense<0.000000e+00> : vector<2x128xf32>
    %239 = tpu.matmul %238, %3, %cst_49 {dimension_numbers = #tpu.dot_dimension_numbers<[1], [0], [0], [1], [0, 0, 1, 1], [], []>} : vector<2x8xf32>, vector<8x128xf32>, vector<2x128xf32> -> vector<2x128xf32>
    %cst_50 = arith.constant dense<0.000000e+00> : vector<2x128xf32>
    %240 = tpu.matmul %232, %4, %cst_50 {dimension_numbers = #tpu.dot_dimension_numbers<[1], [0], [0], [1], [0, 0, 1, 1], [], []>} : vector<2x32xf32>, vector<32x128xf32>, vector<2x128xf32> -> vector<2x128xf32>
    %241 = arith.addf %239, %240 : vector<2x128xf32>
    %242 = vector.broadcast %5 : vector<1x128xf32> to vector<2x128xf32>
    %243 = arith.addf %241, %242 : vector<2x128xf32>
    %244 = vector.extract_strided_slice %243 {offsets = [0, 0], sizes = [2, 96], strides = [1, 1]} : vector<2x128xf32> to vector<2x96xf32>
    %245 = arith.negf %244 : vector<2x96xf32>
    %246 = math.exp %245 : vector<2x96xf32>
    %cst_51 = arith.constant 1.000000e+00 : f32
    %247 = vector.broadcast %cst_51 : f32 to vector<2x96xf32>
    %248 = arith.addf %247, %246 : vector<2x96xf32>
    %249 = arith.divf %247, %248 : vector<2x96xf32>
    %250 = vector.extract_strided_slice %249 {offsets = [0, 0], sizes = [2, 32], strides = [1, 1]} : vector<2x96xf32> to vector<2x32xf32>
    %251 = vector.extract_strided_slice %249 {offsets = [0, 32], sizes = [2, 32], strides = [1, 1]} : vector<2x96xf32> to vector<2x32xf32>
    %252 = vector.extract_strided_slice %249 {offsets = [0, 64], sizes = [2, 32], strides = [1, 1]} : vector<2x96xf32> to vector<2x32xf32>
    %253 = vector.extract_strided_slice %243 {offsets = [0, 96], sizes = [2, 32], strides = [1, 1]} : vector<2x128xf32> to vector<2x32xf32>
    %254 = math.tanh %253 : vector<2x32xf32>
    %255 = arith.mulf %251, %235 : vector<2x32xf32>
    %256 = arith.mulf %250, %254 : vector<2x32xf32>
    %257 = arith.addf %255, %256 : vector<2x32xf32>
    %258 = math.tanh %257 : vector<2x32xf32>
    %259 = arith.mulf %252, %258 : vector<2x32xf32>
    %260 = vector.broadcast %c7_i32 : i32 to vector<2x1xi32>
    %261 = arith.cmpi slt, %260, %9 : vector<2x1xi32>
    %262 = vector.shape_cast %261 : vector<2x1xi1> to vector<2x1xi1>
    %263 = vector.broadcast %262 : vector<2x1xi1> to vector<2x32xi1>
    %264 = arith.select %263, %259, %232 : vector<2x32xi1>, vector<2x32xf32>
    %265 = vector.shape_cast %261 : vector<2x1xi1> to vector<2x1xi1>
    %266 = vector.broadcast %265 : vector<2x1xi1> to vector<2x32xi1>
    %267 = arith.select %266, %257, %235 : vector<2x32xi1>, vector<2x32xf32>
    %c8_i32_52 = arith.constant 8 : i32
    %c0_53 = arith.constant 0 : index
    %c0_54 = arith.constant 0 : index
    %268 = vector.load %arg13[%c0_53, %c0_54] : memref<2x32xf32, #tpu.memory_space<vmem>>, vector<2x32xf32>
    tpu.vector_store %arg13[%c0_53, %c0_54], %264 {strides = array<i32>} : memref<2x32xf32, #tpu.memory_space<vmem>>, vector<2x32xf32>,
    %c0_55 = arith.constant 0 : index
    %c0_56 = arith.constant 0 : index
    %269 = vector.load %arg14[%c0_55, %c0_56] : memref<2x32xf32, #tpu.memory_space<vmem>>, vector<2x32xf32>
    tpu.vector_store %arg14[%c0_55, %c0_56], %267 {strides = array<i32>} : memref<2x32xf32, #tpu.memory_space<vmem>>, vector<2x32xf32>,
    %c0_i32_57 = arith.constant 0 : i32
    %270 = arith.cmpi eq, %arg1, %c0_i32_57 : i32
    %271 = arith.extui %270 : i1 to i32
    %c0_i32_58 = arith.constant 0 : i32
    %272 = arith.cmpi ne, %271, %c0_i32_58 : i32
    scf.if %272 {
      %c0_59 = arith.constant 0 : index
      %c0_60 = arith.constant 0 : index
      %273 = vector.load %arg7[%c0_59, %c0_60] : memref<2x4xf32, #tpu.memory_space<vmem>>, vector<2x4xf32>
      %cst_61 = arith.constant -0.105360515 : f32
      %274 = vector.broadcast %cst_61 : f32 to vector<2x4xf32>
      %275 = arith.mulf %273, %274 : vector<2x4xf32>
      %276 = math.exp %275 : vector<2x4xf32>
      %277 = vector.shape_cast %276 : vector<2x4xf32> to vector<2x4x1xf32>
      %c0_62 = arith.constant 0 : index
      %c0_63 = arith.constant 0 : index
      %c0_64 = arith.constant 0 : index
      %278 = vector.load %arg8[%c0_62, %c0_63, %c0_64] : memref<2x4x768xf32, #tpu.memory_space<vmem>>, vector<2x4x768xf32>
      %279 = vector.broadcast %277 : vector<2x4x1xf32> to vector<2x4x768xf32>
      %280 = arith.mulf %279, %278 : vector<2x4x768xf32>
      %cst_65 = arith.constant dense<0.000000e+00> : vector<2x768xf32>
      %281 = vector.multi_reduction <add>, %280, %cst_65 [1] : vector<2x4x768xf32> to vector<2x768xf32>
      %cst_66 = arith.constant dense<0.000000e+00> : vector<2xf32>
      %282 = vector.multi_reduction <add>, %264, %cst_66 [1] : vector<2x32xf32> to vector<2xf32>
      %283 = vector.shape_cast %282 : vector<2xf32> to vector<2x1xf32>
      %cst_67 = arith.constant dense<0.000000e+00> : vector<2xf32>
      %284 = vector.multi_reduction <add>, %281, %cst_67 [1] : vector<2x768xf32> to vector<2xf32>
      %285 = vector.shape_cast %284 : vector<2xf32> to vector<2x1xf32>
      %286 = arith.addf %283, %285 : vector<2x1xf32>
      %cst_68 = arith.constant 1.250000e-03 : f32
      %287 = vector.broadcast %cst_68 : f32 to vector<2x1xf32>
      %288 = arith.mulf %286, %287 : vector<2x1xf32>
      %289 = vector.broadcast %288 : vector<2x1xf32> to vector<2x32xf32>
      %290 = arith.subf %264, %289 : vector<2x32xf32>
      %291 = vector.broadcast %288 : vector<2x1xf32> to vector<2x768xf32>
      %292 = arith.subf %281, %291 : vector<2x768xf32>
      %293 = arith.mulf %290, %290 : vector<2x32xf32>
      %cst_69 = arith.constant dense<0.000000e+00> : vector<2xf32>
      %294 = vector.multi_reduction <add>, %293, %cst_69 [1] : vector<2x32xf32> to vector<2xf32>
      %295 = vector.shape_cast %294 : vector<2xf32> to vector<2x1xf32>
      %296 = arith.mulf %292, %292 : vector<2x768xf32>
      %cst_70 = arith.constant dense<0.000000e+00> : vector<2xf32>
      %297 = vector.multi_reduction <add>, %296, %cst_70 [1] : vector<2x768xf32> to vector<2xf32>
      %298 = vector.shape_cast %297 : vector<2xf32> to vector<2x1xf32>
      %299 = arith.addf %295, %298 : vector<2x1xf32>
      %cst_71 = arith.constant 1.250000e-03 : f32
      %300 = vector.broadcast %cst_71 : f32 to vector<2x1xf32>
      %301 = arith.mulf %299, %300 : vector<2x1xf32>
      %cst_72 = arith.constant 9.99999974E-6 : f32
      %302 = vector.broadcast %cst_72 : f32 to vector<2x1xf32>
      %303 = arith.addf %301, %302 : vector<2x1xf32>
      %304 = math.rsqrt %303 : vector<2x1xf32>
      %305 = vector.broadcast %304 : vector<2x1xf32> to vector<2x32xf32>
      %306 = arith.mulf %290, %305 : vector<2x32xf32>
      %307 = vector.broadcast %304 : vector<2x1xf32> to vector<2x768xf32>
      %308 = arith.mulf %292, %307 : vector<2x768xf32>
      %c0_73 = arith.constant 0 : index
      %c0_74 = arith.constant 0 : index
      %309 = vector.load %arg9[%c0_73, %c0_74] : memref<32x128xf32, #tpu.memory_space<vmem>>, vector<32x128xf32>
      %cst_75 = arith.constant dense<0.000000e+00> : vector<2x128xf32>
      %310 = tpu.matmul %306, %309, %cst_75 {dimension_numbers = #tpu.dot_dimension_numbers<[1], [0], [0], [1], [0, 0, 1, 1], [], []>} : vector<2x32xf32>, vector<32x128xf32>, vector<2x128xf32> -> vector<2x128xf32>
      %c0_76 = arith.constant 0 : index
      %c0_77 = arith.constant 0 : index
      %311 = vector.load %arg10[%c0_76, %c0_77] : memref<768x128xf32, #tpu.memory_space<vmem>>, vector<768x128xf32>
      %cst_78 = arith.constant dense<0.000000e+00> : vector<2x128xf32>
      %312 = tpu.matmul %308, %311, %cst_78 {dimension_numbers = #tpu.dot_dimension_numbers<[1], [0], [0], [1], [0, 0, 1, 1], [], []>} : vector<2x768xf32>, vector<768x128xf32>, vector<2x128xf32> -> vector<2x128xf32>
      %313 = arith.addf %310, %312 : vector<2x128xf32>
      %c0_79 = arith.constant 0 : index
      %c0_80 = arith.constant 0 : index
      %314 = vector.load %arg11[%c0_79, %c0_80] : memref<1x128xf32, #tpu.memory_space<vmem>>, vector<1x128xf32>
      %315 = vector.broadcast %314 : vector<1x128xf32> to vector<2x128xf32>
      %316 = arith.addf %313, %315 : vector<2x128xf32>
      %cst_81 = arith.constant 0.000000e+00 : f32
      %317 = vector.broadcast %cst_81 : f32 to vector<2x128xf32>
      %318 = arith.maximumf %316, %317 : vector<2x128xf32>
      %c0_82 = arith.constant 0 : index
      %c0_83 = arith.constant 0 : index
      %319 = vector.load %arg12[%c0_82, %c0_83] : memref<2x128xf32, #tpu.memory_space<vmem>>, vector<2x128xf32>
      tpu.vector_store %arg12[%c0_82, %c0_83], %318 {strides = array<i32>} : memref<2x128xf32, #tpu.memory_space<vmem>>, vector<2x128xf32>,
    } else {
    }
    return
  }
  func.func @transform_0(%arg0: i32, %arg1: i32) -> (i32, i32) {
    %c0_i32 = arith.constant 0 : i32
    %c0_i32_0 = arith.constant 0 : i32
    return %arg0, %c0_i32 : i32, i32
  }
  func.func @transform_1(%arg0: i32, %arg1: i32) -> (i32, i32, i32) {
    %c0_i32 = arith.constant 0 : i32
    %c0_i32_0 = arith.constant 0 : i32
    return %arg1, %arg0, %c0_i32 : i32, i32, i32
  }
  func.func @transform_2(%arg0: i32, %arg1: i32) -> (i32, i32) {
    %c0_i32 = arith.constant 0 : i32
    %c0_i32_0 = arith.constant 0 : i32
    %c0_i32_1 = arith.constant 0 : i32
    return %c0_i32, %c0_i32_0 : i32, i32
  }
  func.func @transform_3(%arg0: i32, %arg1: i32) -> (i32, i32) {
    %c0_i32 = arith.constant 0 : i32
    %c0_i32_0 = arith.constant 0 : i32
    %c0_i32_1 = arith.constant 0 : i32
    return %c0_i32, %c0_i32_0 : i32, i32
  }
  func.func @transform_4(%arg0: i32, %arg1: i32) -> (i32, i32) {
    %c0_i32 = arith.constant 0 : i32
    %c0_i32_0 = arith.constant 0 : i32
    %c0_i32_1 = arith.constant 0 : i32
    return %c0_i32, %c0_i32_0 : i32, i32
  }
  func.func @transform_5(%arg0: i32, %arg1: i32) -> (i32, i32) {
    %c0_i32 = arith.constant 0 : i32
    %c0_i32_0 = arith.constant 0 : i32
    return %arg0, %c0_i32 : i32, i32
  }
  func.func @transform_6(%arg0: i32, %arg1: i32) -> (i32, i32, i32) {
    %c0_i32 = arith.constant 0 : i32
    %c0_i32_0 = arith.constant 0 : i32
    %c0_i32_1 = arith.constant 0 : i32
    return %arg0, %c0_i32, %c0_i32_0 : i32, i32, i32
  }
  func.func @transform_7(%arg0: i32, %arg1: i32) -> (i32, i32) {
    %c0_i32 = arith.constant 0 : i32
    %c0_i32_0 = arith.constant 0 : i32
    %c0_i32_1 = arith.constant 0 : i32
    return %c0_i32, %c0_i32_0 : i32, i32
  }
  func.func @transform_8(%arg0: i32, %arg1: i32) -> (i32, i32) {
    %c0_i32 = arith.constant 0 : i32
    %c0_i32_0 = arith.constant 0 : i32
    %c0_i32_1 = arith.constant 0 : i32
    return %c0_i32, %c0_i32_0 : i32, i32
  }
  func.func @transform_9(%arg0: i32, %arg1: i32) -> (i32, i32) {
    %c0_i32 = arith.constant 0 : i32
    %c0_i32_0 = arith.constant 0 : i32
    %c0_i32_1 = arith.constant 0 : i32
    return %c0_i32, %c0_i32_0 : i32, i32
  }
  func.func @transform_10(%arg0: i32, %arg1: i32) -> (i32, i32) {
    %c0_i32 = arith.constant 0 : i32
    %c0_i32_0 = arith.constant 0 : i32
    return %arg0, %c0_i32 : i32, i32
  }
}

</mosaic_0001>

<llo_original>
// kernel: losnet_forward.1
$region0: #{losnet_forward.1}
  #allocation0 [shape = 'u32[]', space=smem, size = 0x4, offset = 0x4, fixed_abs, tag = 'smem constant byte address 0x4 - core index']
  #allocation1 [shape = 'u32[72,128]{1,0:T(1,128)}', space=vmem, size = 0x9000, scoped, tag = 'internal scratch']
  #allocation2 [shape = 'f32[2,32]{1,0:T(2,128)}', space=vmem, size = 0x400, scoped, tag = 'scratch operand']
  #allocation3 [shape = 'f32[2,32]{1,0:T(2,128)}', space=vmem, size = 0x400, scoped, tag = 'scratch operand']
  %s0 = inlined_call_operand.vmem [shape: s32[2,1], index: 0, kind: input, shape index: {}]
  %s1 = inlined_call_operand.vmem [shape: f32[8,2,8], index: 1, kind: input, shape index: {}]
  %s2 = inlined_call_operand.hbm [shape: f32[8,128], index: 2, kind: input, shape index: {}]
  %s3 = inlined_call_operand.vmem [shape: f32[32,128], index: 3, kind: input, shape index: {}]
  %s4 = inlined_call_operand.vmem [shape: f32[1,128], index: 4, kind: input, shape index: {}]
  %s5 = inlined_call_operand.vmem [shape: f32[2,4], index: 5, kind: input, shape index: {}]
  %s6 = inlined_call_operand.hbm [shape: f32[2,4,768], index: 6, kind: input, shape index: {}]
  %s7 = inlined_call_operand.hbm [shape: f32[32,128], index: 7, kind: input, shape index: {}]
  %s8 = inlined_call_operand.hbm [shape: f32[768,128], index: 8, kind: input, shape index: {}]
  %s9 = inlined_call_operand.hbm [shape: f32[1,128], index: 9, kind: input, shape index: {}]
  %s10 = inlined_call_operand.hbm [shape: f32[2,128], index: 10, kind: output, shape index: {}]
  %s11 = sld [smem:[#allocation0]]
  $region78: #{losnet_forward.1} parent=0
    _
  %s13 = ssub.s32 1, %s11
  %s14 = scalar_select 0, %s13, %s11
  $region1: #{losnet_forward.1} parent=0
    #allocation4 [shape = 'u8[4096]{0}', space=vmem, size = 0x1000, scoped, tag = 'input window, operand 2, single buffered']
    #allocation5 [shape = 's32[1]{0}', space=sflag, size = 0x4, scoped, tag = 'scoped memory for losnet_forward.1']
    #allocation6 [shape = 's32[1]{0}', space=sflag, size = 0x4, scoped, tag = 'scoped memory for losnet_forward.1']
    #allocation7 [shape = 'u8[24576]{0}', space=vmem, size = 0x6000, scoped, tag = 'input window, operand 6, single buffered']
    #allocation8 [shape = 's32[1]{0}', space=sflag, size = 0x4, scoped, tag = 'scoped memory for losnet_forward.1']
    #allocation9 [shape = 'u8[16384]{0}', space=vmem, size = 0x4000, scoped, tag = 'input window, operand 7, single buffered']
    #allocation10 [shape = 'u8[393216]{0}', space=vmem, size = 0x60000, scoped, tag = 'input window, operand 8, single buffered']
    #allocation11 [shape = 's32[1]{0}', space=sflag, size = 0x4, scoped, tag = 'scoped memory for losnet_forward.1']
    #allocation12 [shape = 'u8[512]{0}', space=vmem, size = 0x400, scoped, tag = 'input window, operand 9, single buffered']
    #allocation13 [shape = 'u8[1024]{0}', space=vmem, size = 0x400, scoped, tag = 'output window, operand 0, single buffered']
    %15 = vsyncpa [#allocation5], 0
    %16 = vsyncpa [#allocation8], 0
    %17 = vsyncpa [#allocation11], 0
    %18 = vsyncpa [#allocation6], 0
    // Predicated region
    $region2: #{losnet_forward.1} parent=1 // pred_check
      _
    $region3: #{losnet_forward.1} parent=1 // pred_check_branch
      %20 = sbr.rel (0) target = $region5
    $region4: #{losnet_forward.1} parent=1 // pred_region
      _
    $region5: #{losnet_forward.1} parent=1 // pred_fallthru
      _
    // Predicated region
    $region6: #{losnet_forward.1} parent=1 // pred_check
      _
    $region7: #{losnet_forward.1} parent=1 // pred_check_branch
      %22 = sbr.rel (0) target = $region9
    $region8: #{losnet_forward.1} parent=1 // pred_region
      _
    $region9: #{losnet_forward.1} parent=1 // pred_fallthru
      _
    // Predicated region
    $region10: #{losnet_forward.1} parent=1 // pred_check
      _
    $region11: #{losnet_forward.1} parent=1 // pred_check_branch
      %24 = sbr.rel (0) target = $region13
    $region12: #{losnet_forward.1} parent=1 // pred_region
      %26 = vsyncadd [#allocation5], 0
      %s28 = sshll.u32 %s2, 4
      %s29 = int_to_ptr.hbm [resolvable:$true] %s28
      %s30 = sshll.u32 [#allocation4], 4
      %s31 = int_to_ptr.vmem [resolvable:$true] %s30
      %33 = dma.hbm_to_vmem [thread:$0]  %s29, 128, %s31, [#allocation5]
    $region13: #{losnet_forward.1} parent=1 // pred_fallthru
      _
    // Predicated region
    $region14: #{losnet_forward.1} parent=1 // pred_check
      _
    $region15: #{losnet_forward.1} parent=1 // pred_check_branch
      %35 = sbr.rel (0) target = $region17
    $region16: #{losnet_forward.1} parent=1 // pred_region
      _
    $region17: #{losnet_forward.1} parent=1 // pred_fallthru
      _
    // Predicated region
    $region18: #{losnet_forward.1} parent=1 // pred_check
      _
    $region19: #{losnet_forward.1} parent=1 // pred_check_branch
      %37 = sbr.rel (0) target = $region21
    $region20: #{losnet_forward.1} parent=1 // pred_region
      _
    $region21: #{losnet_forward.1} parent=1 // pred_fallthru
      _
    // Predicated region
    $region22: #{losnet_forward.1} parent=1 // pred_check
      _
    $region23: #{losnet_forward.1} parent=1 // pred_check_branch
      %39 = sbr.rel (0) target = $region25
    $region24: #{losnet_forward.1} parent=1 // pred_region
      _
    $region25: #{losnet_forward.1} parent=1 // pred_fallthru
      _
    // Predicated region
    $region26: #{losnet_forward.1} parent=1 // pred_check
      _
    $region27: #{losnet_forward.1} parent=1 // pred_check_branch
      %41 = sbr.rel (0) target = $region29
    $region28: #{losnet_forward.1} parent=1 // pred_region
      %43 = vsyncadd [#allocation8], 0
      %s44 = sshll.u32 %s6, 4
      %s45 = int_to_ptr.hbm [resolvable:$true] %s44
      %s46 = sshll.u32 [#allocation7], 4
      %s47 = int_to_ptr.vmem [resolvable:$true] %s46
      %52 = dma.hbm_to_vmem [thread:$0]  %s45, 768, %s47, [#allocation8], 384, 384, 24
    $region29: #{losnet_forward.1} parent=1 // pred_fallthru
      _
    // Predicated region
    $region30: #{losnet_forward.1} parent=1 // pred_check
      _
    $region31: #{losnet_forward.1} parent=1 // pred_check_branch
      %54 = sbr.rel (0) target = $region33
    $region32: #{losnet_forward.1} parent=1 // pred_region
      %56 = vsyncadd [#allocation8], 0
      %s57 = sshll.u32 %s7, 4
      %s58 = int_to_ptr.hbm [resolvable:$true] %s57
      %s59 = sshll.u32 [#allocation9], 4
      %s60 = int_to_ptr.vmem [resolvable:$true] %s59
      %65 = dma.hbm_to_vmem [thread:$0]  %s58, 512, %s60, [#allocation8], 128, 128, 8
    $region33: #{losnet_forward.1} parent=1 // pred_fallthru
      _
    // Predicated region
    $region34: #{losnet_forward.1} parent=1 // pred_check
      _
    $region35: #{losnet_forward.1} parent=1 // pred_check_branch
      %67 = sbr.rel (0) target = $region37
    $region36: #{losnet_forward.1} parent=1 // pred_region
      %69 = vsyncadd [#allocation11], 0
      %s70 = sshll.u32 %s8, 4
      %s71 = int_to_ptr.hbm [resolvable:$true] %s70
      %s72 = sshll.u32 [#allocation10], 4
      %s73 = int_to_ptr.vmem [resolvable:$true] %s72
      %78 = dma.hbm_to_vmem [thread:$0]  %s71, 12288, %s73, [#allocation11], 128, 128, 8
    $region37: #{losnet_forward.1} parent=1 // pred_fallthru
      _
    // Predicated region
    $region38: #{losnet_forward.1} parent=1 // pred_check
      _
    $region39: #{losnet_forward.1} parent=1 // pred_check_branch
      %80 = sbr.rel (0) target = $region41
    $region40: #{losnet_forward.1} parent=1 // pred_region
      %82 = vsyncadd [#allocation11], 0
      %s84 = sshll.u32 %s9, 4
      %s85 = int_to_ptr.hbm [resolvable:$true] %s84
      %s86 = sshll.u32 [#allocation12], 4
      %s87 = int_to_ptr.vmem [resolvable:$true] %s86
      %89 = dma.hbm_to_vmem [thread:$0]  %s85, 16, %s87, [#allocation11]
    $region41: #{losnet_forward.1} parent=1 // pred_fallthru
      _
    // Predicated region
    $region42: #{losnet_forward.1} parent=1 // pred_check
      _
    $region43: #{losnet_forward.1} parent=1 // pred_check_branch
      %91 = sbr.rel (0) target = $region45
    $region44: #{losnet_forward.1} parent=1 // pred_region
      %93 = dma.done [#allocation5], 128
    $region45: #{losnet_forward.1} parent=1 // pred_fallthru
      _
    // Predicated region
    $region46: #{losnet_forward.1} parent=1 // pred_check
      _
    $region47: #{losnet_forward.1} parent=1 // pred_check_branch
      %95 = sbr.rel (0) target = $region49
    $region48: #{losnet_forward.1} parent=1 // pred_region
      %97 = dma.done [#allocation8], 768
    $region49: #{losnet_forward.1} parent=1 // pred_fallthru
      _
    // Predicated region
    $region50: #{losnet_forward.1} parent=1 // pred_check
      _
    $region51: #{losnet_forward.1} parent=1 // pred_check_branch
      %99 = sbr.rel (0) target = $region53
    $region52: #{losnet_forward.1} parent=1 // pred_region
      %101 = dma.done [#allocation8], 512
    $region53: #{losnet_forward.1} parent=1 // pred_fallthru
      _
    // Predicated region
    $region54: #{losnet_forward.1} parent=1 // pred_check
      _
    $region55: #{losnet_forward.1} parent=1 // pred_check_branch
      %103 = sbr.rel (0) target = $region57
    $region56: #{losnet_forward.1} parent=1 // pred_region
      %105 = dma.done [#allocation11], 12288
    $region57: #{losnet_forward.1} parent=1 // pred_fallthru
      _
    // Predicated region
    $region58: #{losnet_forward.1} parent=1 // pred_check
      _
    $region59: #{losnet_forward.1} parent=1 // pred_check_branch
      %107 = sbr.rel (0) target = $region61
    $region60: #{losnet_forward.1} parent=1 // pred_region
      %109 = dma.done [#allocation11], 16
    $region61: #{losnet_forward.1} parent=1 // pred_fallthru
      _
    %p110 = scmp.eq.s32.totalorder 0, 0
    // Predicated region
    $region62: #{losnet_forward.1} parent=1 // pred_check
      %p111 = pneg %p110
    $region63: #{losnet_forward.1} parent=1 // pred_check_branch
      %113 = sbr.rel (%p111) target = $region65
    $region64: #{losnet_forward.1} parent=1 // pred_region
      %vm114 = vcmask 254976
      %115 = vst.msk [vmem:[#allocation2] sm:$0x3] %vm114, 0.0
      %116 = vst.msk [vmem:[#allocation3] sm:$0x3] %vm114, 0.0
    $region65: #{losnet_forward.1} parent=1 // pred_fallthru
      _
    %v117 = vld [vmem:[#allocation4] sm:$0xff]
    %v118 = vld [vmem:[%s3] sm:$0xff]
    %v119 = vld [vmem:[%s3 + $0x8] sm:$0xff]
    %v120 = vld [vmem:[%s3 + $0x10] sm:$0xff]
    %v121 = vld [vmem:[%s3 + $0x18] sm:$0xff]
    %v122 = vld [vmem:[%s4] sm:$0x1]
    %v123 = vld [vmem:[%s0] sm:$0x3]
    %s124 = smul.u32 0, 8
    %v125 = vstv %s124
    %v126 = vsub.s32 %v123, %v125
    %v127 = vld [vmem:[#allocation2] sm:$0x3]
    %v128 = vld [vmem:[#allocation3] sm:$0x3]
    %v129 = vld [vmem:[%s1] sm:$0x3]
    %vm130 = vcmask 261120
    %v132 = vsel %vm130, %v127, 0
    %134 = vmatpush.msra.mxu0 0.0
    %135 = vmatpush.msra.mxu0 0.0
    %136 = vmatpush.msra.mxu0 0.0
    %137 = vmatpush.msra.mxu0 0.0
    %138 = vmatpush.msra.mxu0 0.0
    %139 = vmatpush.msra.mxu0 0.0
    %140 = vmatpush.msra.mxu0 0.0
    %141 = vmatpush.msra.mxu0 0.0
    %142 = vmatpush.msra.mxu0 0.0
    %143 = vmatpush.msra.mxu0 0.0
    %144 = vmatpush.msra.mxu0 0.0
    %145 = vmatpush.msra.mxu0 0.0
    %146 = vmatpush.msra.mxu0 %v121
    %147 = vmatpush.msra.mxu0 %v120
    %148 = vmatpush.msra.mxu0 %v119
    %149 = vmatpush.msra.mxu0 %v118
    %150 = vmatmul.f32.gmra.mxu0 %v132
    %v151 = vpop.f32.mrf.mxu0
    %v152 = vadd.f32 0.0, %v151
    %153 = vdwg.mxu0
    %vm154 = vcmask 64512
    %v156 = vsel %vm154, %v129, 0
    %158 = vmatpush.msra.mxu0 0.0
    %159 = vmatpush.msra.mxu0 0.0
    %160 = vmatpush.msra.mxu0 0.0
    %161 = vmatpush.msra.mxu0 0.0
    %162 = vmatpush.msra.mxu0 0.0
    %163 = vmatpush.msra.mxu0 0.0
    %164 = vmatpush.msra.mxu0 0.0
    %165 = vmatpush.msra.mxu0 0.0
    %166 = vmatpush.msra.mxu0 0.0
    %167 = vmatpush.msra.mxu0 0.0
    %168 = vmatpush.msra.mxu0 0.0
    %169 = vmatpush.msra.mxu0 0.0
    %170 = vmatpush.msra.mxu0 0.0
    %171 = vmatpush.msra.mxu0 0.0
    %172 = vmatpush.msra.mxu0 0.0
    %173 = vmatpush.msra.mxu0 %v117
    %174 = vmatmul.f32.gmra.mxu0 %v156
    %v175 = vpop.f32.mrf.mxu0
    %v176 = vadd.f32 %v152, %v175
    %177 = vdwg.mxu0
    %v179 = vperm.slane %v122, 0
    %v181 = vadd.f32 %v176, %v179
    %v182 = vxor.u32 %v181, 2147483648
    %v183 = vmul.f32 %v182, 1.442695
    %v184 = vpow.pop %v183
    %v185 = vadd.f32 %v184, 1.0
    %v186 = vrcp.pop %v185
    %v187 = vmul.f32 %v185, %v186
    %v188 = vsub.f32 1.0, %v187
    %v189 = vmul.f32 %v186, %v188
    %v190 = vadd.f32 %v186, %v189
    %vm191 = vweird.f32 %v185
    %vm192 = vweird.f32 %v186
    %vm193 = vmor %vm191, %vm192
    %v194 = vsel %vm193, %v186, %v190
    %v195 = vand.u32 2147483647, %v185
    %vm196 = vcmp.eq.f32.partialorder %v195, 8.507059e+37
    %v197 = vand.u32 %v185, 2147483648
    %v198 = vor.u32 1.1754944e-38, %v197
    %v199 = vsel %vm196, %v198, %v194
    %v200 = vmul.f32 1.0, %v199
    %v201 = vtanh.pop %v181
    %203 = vrot.lane.b32.xlu0 %v128, 32
    %v204 = vpop.permute.xlu0 %203
    %v206 = vmul.f32 %v200, %v204
    %208 = vrot.lane.b32.xlu0 %v201, 32
    %v209 = vpop.permute.xlu0 %208
    %v211 = vmul.f32 %v200, %v209
    %213 = vrot.lane.b32.xlu0 %v211, 32
    %v214 = vpop.permute.xlu0 %213
    %v216 = vadd.f32 %v206, %v214
    %v217 = vtanh.pop %v216
    %219 = vrot.lane.b32.xlu0 %v217, 32
    %v220 = vpop.permute.xlu0 %219
    %v222 = vmul.f32 %v200, %v220
    %vm223 = vcmp.gt.s32.totalorder %v126, 0
    %v224 = vsel %vm223, 1, 0
    %225 = vset.pattern.permute.xlu0 0
    %226 = vperm.xlu0 %225, %v224
    %v227 = vpop.permute.xlu0 %226
    %vm228 = vcmp.eq.s32.totalorder %v227, 1
    %229 = vrot.lane.b32.xlu0 %v127, 64
    %v230 = vpop.permute.xlu0 %229
    %v232 = vsel %vm228, %v222, %v230
    %v233 = vsel %vm228, %v216, %v204
    %s234 = scalar_lea.vmem %s1, 2
    %v235 = vld [vmem:[%s234] sm:$0x3]
    %237 = vrot.lane.b32.xlu0 %v232, 64
    %v238 = vpop.permute.xlu0 %237
    %v239 = vsel %vm130, %v238, 0
    %241 = vmatpush.msra.mxu0 0.0
    %242 = vmatpush.msra.mxu0 0.0
    %243 = vmatpush.msra.mxu0 0.0
    %244 = vmatpush.msra.mxu0 0.0
    %245 = vmatpush.msra.mxu0 0.0
    %246 = vmatpush.msra.mxu0 0.0
    %247 = vmatpush.msra.mxu0 0.0
    %248 = vmatpush.msra.mxu0 0.0
    %249 = vmatpush.msra.mxu0 0.0
    %250 = vmatpush.msra.mxu0 0.0
    %251 = vmatpush.msra.mxu0 0.0
    %252 = vmatpush.msra.mxu0 0.0
    %253 = vmatpush.msra.mxu0 %v121
    %254 = vmatpush.msra.mxu0 %v120
    %255 = vmatpush.msra.mxu0 %v119
    %256 = vmatpush.msra.mxu0 %v118
    %257 = vmatmul.f32.gmra.mxu0 %v239
    %v258 = vpop.f32.mrf.mxu0
    %v259 = vadd.f32 0.0, %v258
    %260 = vdwg.mxu0
    %v262 = vsel %vm154, %v235, 0
    %264 = vmatpush.msra.mxu0 0.0
    %265 = vmatpush.msra.mxu0 0.0
    %266 = vmatpush.msra.mxu0 0.0
    %267 = vmatpush.msra.mxu0 0.0
    %268 = vmatpush.msra.mxu0 0.0
    %269 = vmatpush.msra.mxu0 0.0
    %270 = vmatpush.msra.mxu0 0.0
    %271 = vmatpush.msra.mxu0 0.0
    %272 = vmatpush.msra.mxu0 0.0
    %273 = vmatpush.msra.mxu0 0.0
    %274 = vmatpush.msra.mxu0 0.0
    %275 = vmatpush.msra.mxu0 0.0
    %276 = vmatpush.msra.mxu0 0.0
    %277 = vmatpush.msra.mxu0 0.0
    %278 = vmatpush.msra.mxu0 0.0
    %279 = vmatpush.msra.mxu0 %v117
    %280 = vmatmul.f32.gmra.mxu0 %v262
    %v281 = vpop.f32.mrf.mxu0
    %v282 = vadd.f32 %v259, %v281
    %283 = vdwg.mxu0
    %v284 = vadd.f32 %v282, %v179
    %v285 = vxor.u32 %v284, 2147483648
    %v286 = vmul.f32 %v285, 1.442695
    %v287 = vpow.pop %v286
    %v288 = vadd.f32 %v287, 1.0
    %v289 = vrcp.pop %v288
    %v290 = vmul.f32 %v288, %v289
    %v291 = vsub.f32 1.0, %v290
    %v292 = vmul.f32 %v289, %v291
    %v293 = vadd.f32 %v289, %v292
    %vm294 = vweird.f32 %v288
    %vm295 = vweird.f32 %v289
    %vm296 = vmor %vm294, %vm295
    %v297 = vsel %vm296, %v289, %v293
    %v298 = vand.u32 2147483647, %v288
    %vm299 = vcmp.eq.f32.partialorder %v298, 8.507059e+37
    %v300 = vand.u32 %v288, 2147483648
    %v301 = vor.u32 1.1754944e-38, %v300
    %v302 = vsel %vm299, %v301, %v297
    %v303 = vmul.f32 1.0, %v302
    %v304 = vtanh.pop %v284
    %v305 = vmul.f32 %v303, %v233
    %307 = vrot.lane.b32.xlu0 %v304, 32
    %v308 = vpop.permute.xlu0 %307
    %v310 = vmul.f32 %v303, %v308
    %312 = vrot.lane.b32.xlu0 %v310, 32
    %v313 = vpop.permute.xlu0 %312
    %v315 = vadd.f32 %v305, %v313
    %v316 = vtanh.pop %v315
    %318 = vrot.lane.b32.xlu0 %v316, 32
    %v319 = vpop.permute.xlu0 %318
    %v321 = vmul.f32 %v303, %v319
    %vm322 = vcmp.gt.s32.totalorder %v126, 1
    %v323 = vsel %vm322, 1, 0
    %324 = vset.pattern.permute.xlu0 0
    %325 = vperm.xlu0 %324, %v323
    %v326 = vpop.permute.xlu0 %325
    %vm327 = vcmp.eq.s32.totalorder %v326, 1
    %v328 = vsel %vm327, %v321, %v232
    %v329 = vsel %vm327, %v315, %v233
    %s330 = scalar_lea.vmem %s1, 4
    %v331 = vld [vmem:[%s330] sm:$0x3]
    %333 = vrot.lane.b32.xlu0 %v328, 64
    %v334 = vpop.permute.xlu0 %333
    %v335 = vsel %vm130, %v334, 0
    %337 = vmatpush.msra.mxu0 0.0
    %338 = vmatpush.msra.mxu0 0.0
    %339 = vmatpush.msra.mxu0 0.0
    %340 = vmatpush.msra.mxu0 0.0
    %341 = vmatpush.msra.mxu0 0.0
    %342 = vmatpush.msra.mxu0 0.0
    %343 = vmatpush.msra.mxu0 0.0
    %344 = vmatpush.msra.mxu0 0.0
    %345 = vmatpush.msra.mxu0 0.0
    %346 = vmatpush.msra.mxu0 0.0
    %347 = vmatpush.msra.mxu0 0.0
    %348 = vmatpush.msra.mxu0 0.0
    %349 = vmatpush.msra.mxu0 %v121
    %350 = vmatpush.msra.mxu0 %v120
    %351 = vmatpush.msra.mxu0 %v119
    %352 = vmatpush.msra.mxu0 %v118
    %353 = vmatmul.f32.gmra.mxu0 %v335
    %v354 = vpop.f32.mrf.mxu0
    %v355 = vadd.f32 0.0, %v354
    %356 = vdwg.mxu0
    %v358 = vsel %vm154, %v331, 0
    %360 = vmatpush.msra.mxu0 0.0
    %361 = vmatpush.msra.mxu0 0.0
    %362 = vmatpush.msra.mxu0 0.0
    %363 = vmatpush.msra.mxu0 0.0
    %364 = vmatpush.msra.mxu0 0.0
    %365 = vmatpush.msra.mxu0 0.0
    %366 = vmatpush.msra.mxu0 0.0
    %367 = vmatpush.msra.mxu0 0.0
    %368 = vmatpush.msra.mxu0 0.0
    %369 = vmatpush.msra.mxu0 0.0
    %370 = vmatpush.msra.mxu0 0.0
    %371 = vmatpush.msra.mxu0 0.0
    %372 = vmatpush.msra.mxu0 0.0
    %373 = vmatpush.msra.mxu0 0.0
    %374 = vmatpush.msra.mxu0 0.0
    %375 = vmatpush.msra.mxu0 %v117
    %376 = vmatmul.f32.gmra.mxu0 %v358
    %v377 = vpop.f32.mrf.mxu0
    %v378 = vadd.f32 %v355, %v377
    %379 = vdwg.mxu0
    %v380 = vadd.f32 %v378, %v179
    %v381 = vxor.u32 %v380, 2147483648
    %v382 = vmul.f32 %v381, 1.442695
    %v383 = vpow.pop %v382
    %v384 = vadd.f32 %v383, 1.0
    %v385 = vrcp.pop %v384
    %v386 = vmul.f32 %v384, %v385
    %v387 = vsub.f32 1.0, %v386
    %v388 = vmul.f32 %v385, %v387
    %v389 = vadd.f32 %v385, %v388
    %vm390 = vweird.f32 %v384
    %vm391 = vweird.f32 %v385
    %vm392 = vmor %vm390, %vm391
    %v393 = vsel %vm392, %v385, %v389
    %v394 = vand.u32 2147483647, %v384
    %vm395 = vcmp.eq.f32.partialorder %v394, 8.507059e+37
    %v396 = vand.u32 %v384, 2147483648
    %v397 = vor.u32 1.1754944e-38, %v396
    %v398 = vsel %vm395, %v397, %v393
    %v399 = vmul.f32 1.0, %v398
    %v400 = vtanh.pop %v380
    %v401 = vmul.f32 %v399, %v329
    %403 = vrot.lane.b32.xlu0 %v400, 32
    %v404 = vpop.permute.xlu0 %403
    %v406 = vmul.f32 %v399, %v404
    %408 = vrot.lane.b32.xlu0 %v406, 32
    %v409 = vpop.permute.xlu0 %408
    %v411 = vadd.f32 %v401, %v409
    %v412 = vtanh.pop %v411
    %414 = vrot.lane.b32.xlu0 %v412, 32
    %v415 = vpop.permute.xlu0 %414
    %v417 = vmul.f32 %v399, %v415
    %vm418 = vcmp.gt.s32.totalorder %v126, 2
    %v419 = vsel %vm418, 1, 0
    %420 = vset.pattern.permute.xlu0 0
    %421 = vperm.xlu0 %420, %v419
    %v422 = vpop.permute.xlu0 %421
    %vm423 = vcmp.eq.s32.totalorder %v422, 1
    %v424 = vsel %vm423, %v417, %v328
    %v425 = vsel %vm423, %v411, %v329
    %s426 = scalar_lea.vmem %s1, 6
    %v427 = vld [vmem:[%s426] sm:$0x3]
    %429 = vrot.lane.b32.xlu0 %v424, 64
    %v430 = vpop.permute.xlu0 %429
    %v431 = vsel %vm130, %v430, 0
    %433 = vmatpush.msra.mxu0 0.0
    %434 = vmatpush.msra.mxu0 0.0
    %435 = vmatpush.msra.mxu0 0.0
    %436 = vmatpush.msra.mxu0 0.0
    %437 = vmatpush.msra.mxu0 0.0
    %438 = vmatpush.msra.mxu0 0.0
    %439 = vmatpush.msra.mxu0 0.0
    %440 = vmatpush.msra.mxu0 0.0
    %441 = vmatpush.msra.mxu0 0.0
    %442 = vmatpush.msra.mxu0 0.0
    %443 = vmatpush.msra.mxu0 0.0
    %444 = vmatpush.msra.mxu0 0.0
    %445 = vmatpush.msra.mxu0 %v121
    %446 = vmatpush.msra.mxu0 %v120
    %447 = vmatpush.msra.mxu0 %v119
    %448 = vmatpush.msra.mxu0 %v118
    %449 = vmatmul.f32.gmra.mxu0 %v431
    %v450 = vpop.f32.mrf.mxu0
    %v451 = vadd.f32 0.0, %v450
    %452 = vdwg.mxu0
    %v454 = vsel %vm154, %v427, 0
    %456 = vmatpush.msra.mxu0 0.0
    %457 = vmatpush.msra.mxu0 0.0
    %458 = vmatpush.msra.mxu0 0.0
    %459 = vmatpush.msra.mxu0 0.0
    %460 = vmatpush.msra.mxu0 0.0
    %461 = vmatpush.msra.mxu0 0.0
    %462 = vmatpush.msra.mxu0 0.0
    %463 = vmatpush.msra.mxu0 0.0
    %464 = vmatpush.msra.mxu0 0.0
    %465 = vmatpush.msra.mxu0 0.0
    %466 = vmatpush.msra.mxu0 0.0
    %467 = vmatpush.msra.mxu0 0.0
    %468 = vmatpush.msra.mxu0 0.0
    %469 = vmatpush.msra.mxu0 0.0
    %470 = vmatpush.msra.mxu0 0.0
    %471 = vmatpush.msra.mxu0 %v117
    %472 = vmatmul.f32.gmra.mxu0 %v454
    %v473 = vpop.f32.mrf.mxu0
    %v474 = vadd.f32 %v451, %v473
    %475 = vdwg.mxu0
    %v476 = vadd.f32 %v474, %v179
    %v477 = vxor.u32 %v476, 2147483648
    %v478 = vmul.f32 %v477, 1.442695
    %v479 = vpow.pop %v478
    %v480 = vadd.f32 %v479, 1.0
    %v481 = vrcp.pop %v480
    %v482 = vmul.f32 %v480, %v481
    %v483 = vsub.f32 1.0, %v482
    %v484 = vmul.f32 %v481, %v483
    %v485 = vadd.f32 %v481, %v484
    %vm486 = vweird.f32 %v480
    %vm487 = vweird.f32 %v481
    %vm488 = vmor %vm486, %vm487
    %v489 = vsel %vm488, %v481, %v485
    %v490 = vand.u32 2147483647, %v480
    %vm491 = vcmp.eq.f32.partialorder %v490, 8.507059e+37
    %v492 = vand.u32 %v480, 2147483648
    %v493 = vor.u32 1.1754944e-38, %v492
    %v494 = vsel %vm491, %v493, %v489
    %v495 = vmul.f32 1.0, %v494
    %v496 = vtanh.pop %v476
    %v497 = vmul.f32 %v495, %v425
    %499 = vrot.lane.b32.xlu0 %v496, 32
    %v500 = vpop.permute.xlu0 %499
    %v502 = vmul.f32 %v495, %v500
    %504 = vrot.lane.b32.xlu0 %v502, 32
    %v505 = vpop.permute.xlu0 %504
    %v507 = vadd.f32 %v497, %v505
    %v508 = vtanh.pop %v507
    %510 = vrot.lane.b32.xlu0 %v508, 32
    %v511 = vpop.permute.xlu0 %510
    %v513 = vmul.f32 %v495, %v511
    %vm514 = vcmp.gt.s32.totalorder %v126, 3
    %v515 = vsel %vm514, 1, 0
    %516 = vset.pattern.permute.xlu0 0
    %517 = vperm.xlu0 %516, %v515
    %v518 = vpop.permute.xlu0 %517
    %vm519 = vcmp.eq.s32.totalorder %v518, 1
    %v520 = vsel %vm519, %v513, %v424
    %v521 = vsel %vm519, %v507, %v425
    %s522 = scalar_lea.vmem %s1, 8
    %v523 = vld [vmem:[%s522] sm:$0x3]
    %525 = vrot.lane.b32.xlu0 %v520, 64
    %v526 = vpop.permute.xlu0 %525
    %v527 = vsel %vm130, %v526, 0
    %529 = vmatpush.msra.mxu0 0.0
    %530 = vmatpush.msra.mxu0 0.0
    %531 = vmatpush.msra.mxu0 0.0
    %532 = vmatpush.msra.mxu0 0.0
    %533 = vmatpush.msra.mxu0 0.0
    %534 = vmatpush.msra.mxu0 0.0
    %535 = vmatpush.msra.mxu0 0.0
    %536 = vmatpush.msra.mxu0 0.0
    %537 = vmatpush.msra.mxu0 0.0
    %538 = vmatpush.msra.mxu0 0.0
    %539 = vmatpush.msra.mxu0 0.0
    %540 = vmatpush.msra.mxu0 0.0
    %541 = vmatpush.msra.mxu0 %v121
    %542 = vmatpush.msra.mxu0 %v120
    %543 = vmatpush.msra.mxu0 %v119
    %544 = vmatpush.msra.mxu0 %v118
    %545 = vmatmul.f32.gmra.mxu0 %v527
    %v546 = vpop.f32.mrf.mxu0
    %v547 = vadd.f32 0.0, %v546
    %548 = vdwg.mxu0
    %v550 = vsel %vm154, %v523, 0
    %552 = vmatpush.msra.mxu0 0.0
    %553 = vmatpush.msra.mxu0 0.0
    %554 = vmatpush.msra.mxu0 0.0
    %555 = vmatpush.msra.mxu0 0.0
    %556 = vmatpush.msra.mxu0 0.0
    %557 = vmatpush.msra.mxu0 0.0
    %558 = vmatpush.msra.mxu0 0.0
    %559 = vmatpush.msra.mxu0 0.0
    %560 = vmatpush.msra.mxu0 0.0
    %561 = vmatpush.msra.mxu0 0.0
    %562 = vmatpush.msra.mxu0 0.0
    %563 = vmatpush.msra.mxu0 0.0
    %564 = vmatpush.msra.mxu0 0.0
    %565 = vmatpush.msra.mxu0 0.0
    %566 = vmatpush.msra.mxu0 0.0
    %567 = vmatpush.msra.mxu0 %v117
    %568 = vmatmul.f32.gmra.mxu0 %v550
    %v569 = vpop.f32.mrf.mxu0
    %v570 = vadd.f32 %v547, %v569
    %571 = vdwg.mxu0
    %v572 = vadd.f32 %v570, %v179
    %v573 = vxor.u32 %v572, 2147483648
    %v574 = vmul.f32 %v573, 1.442695
    %v575 = vpow.pop %v574
    %v576 = vadd.f32 %v575, 1.0
    %v577 = vrcp.pop %v576
    %v578 = vmul.f32 %v576, %v577
    %v579 = vsub.f32 1.0, %v578
    %v580 = vmul.f32 %v577, %v579
    %v581 = vadd.f32 %v577, %v580
    %vm582 = vweird.f32 %v576
    %vm583 = vweird.f32 %v577
    %vm584 = vmor %vm582, %vm583
    %v585 = vsel %vm584, %v577, %v581
    %v586 = vand.u32 2147483647, %v576
    %vm587 = vcmp.eq.f32.partialorder %v586, 8.507059e+37
    %v588 = vand.u32 %v576, 2147483648
    %v589 = vor.u32 1.1754944e-38, %v588
    %v590 = vsel %vm587, %v589, %v585
    %v591 = vmul.f32 1.0, %v590
    %v592 = vtanh.pop %v572
    %v593 = vmul.f32 %v591, %v521
    %595 = vrot.lane.b32.xlu0 %v592, 32
    %v596 = vpop.permute.xlu0 %595
    %v598 = vmul.f32 %v591, %v596
    %600 = vrot.lane.b32.xlu0 %v598, 32
    %v601 = vpop.permute.xlu0 %600
    %v603 = vadd.f32 %v593, %v601
    %v604 = vtanh.pop %v603
    %606 = vrot.lane.b32.xlu0 %v604, 32
    %v607 = vpop.permute.xlu0 %606
    %v609 = vmul.f32 %v591, %v607
    %vm610 = vcmp.gt.s32.totalorder %v126, 4
    %v611 = vsel %vm610, 1, 0
    %612 = vset.pattern.permute.xlu0 0
    %613 = vperm.xlu0 %612, %v611
    %v614 = vpop.permute.xlu0 %613
    %vm615 = vcmp.eq.s32.totalorder %v614, 1
    %v616 = vsel %vm615, %v609, %v520
    %v617 = vsel %vm615, %v603, %v521
    %s618 = scalar_lea.vmem %s1, 10
    %v619 = vld [vmem:[%s618] sm:$0x3]
    %621 = vrot.lane.b32.xlu0 %v616, 64
    %v622 = vpop.permute.xlu0 %621
    %v623 = vsel %vm130, %v622, 0
    %625 = vmatpush.msra.mxu0 0.0
    %626 = vmatpush.msra.mxu0 0.0
    %627 = vmatpush.msra.mxu0 0.0
    %628 = vmatpush.msra.mxu0 0.0
    %629 = vmatpush.msra.mxu0 0.0
    %630 = vmatpush.msra.mxu0 0.0
    %631 = vmatpush.msra.mxu0 0.0
    %632 = vmatpush.msra.mxu0 0.0
    %633 = vmatpush.msra.mxu0 0.0
    %634 = vmatpush.msra.mxu0 0.0
    %635 = vmatpush.msra.mxu0 0.0
    %636 = vmatpush.msra.mxu0 0.0
    %637 = vmatpush.msra.mxu0 %v121
    %638 = vmatpush.msra.mxu0 %v120
    %639 = vmatpush.msra.mxu0 %v119
    %640 = vmatpush.msra.mxu0 %v118
    %641 = vmatmul.f32.gmra.mxu0 %v623
    %v642 = vpop.f32.mrf.mxu0
    %v643 = vadd.f32 0.0, %v642
    %644 = vdwg.mxu0
    %v646 = vsel %vm154, %v619, 0
    %648 = vmatpush.msra.mxu0 0.0
    %649 = vmatpush.msra.mxu0 0.0
    %650 = vmatpush.msra.mxu0 0.0
    %651 = vmatpush.msra.mxu0 0.0
    %652 = vmatpush.msra.mxu0 0.0
    %653 = vmatpush.msra.mxu0 0.0
    %654 = vmatpush.msra.mxu0 0.0
    %655 = vmatpush.msra.mxu0 0.0
    %656 = vmatpush.msra.mxu0 0.0
    %657 = vmatpush.msra.mxu0 0.0
    %658 = vmatpush.msra.mxu0 0.0
    %659 = vmatpush.msra.mxu0 0.0
    %660 = vmatpush.msra.mxu0 0.0
    %661 = vmatpush.msra.mxu0 0.0
    %662 = vmatpush.msra.mxu0 0.0
    %663 = vmatpush.msra.mxu0 %v117
    %664 = vmatmul.f32.gmra.mxu0 %v646
    %v665 = vpop.f32.mrf.mxu0
    %v666 = vadd.f32 %v643, %v665
    %667 = vdwg.mxu0
    %v668 = vadd.f32 %v666, %v179
    %v669 = vxor.u32 %v668, 2147483648
    %v670 = vmul.f32 %v669, 1.442695
    %v671 = vpow.pop %v670
    %v672 = vadd.f32 %v671, 1.0
    %v673 = vrcp.pop %v672
    %v674 = vmul.f32 %v672, %v673
    %v675 = vsub.f32 1.0, %v674
    %v676 = vmul.f32 %v673, %v675
    %v677 = vadd.f32 %v673, %v676
    %vm678 = vweird.f32 %v672
    %vm679 = vweird.f32 %v673
    %vm680 = vmor %vm678, %vm679
    %v681 = vsel %vm680, %v673, %v677
    %v682 = vand.u32 2147483647, %v672
    %vm683 = vcmp.eq.f32.partialorder %v682, 8.507059e+37
    %v684 = vand.u32 %v672, 2147483648
    %v685 = vor.u32 1.1754944e-38, %v684
    %v686 = vsel %vm683, %v685, %v681
    %v687 = vmul.f32 1.0, %v686
    %v688 = vtanh.pop %v668
    %v689 = vmul.f32 %v687, %v617
    %691 = vrot.lane.b32.xlu0 %v688, 32
    %v692 = vpop.permute.xlu0 %691
    %v694 = vmul.f32 %v687, %v692
    %696 = vrot.lane.b32.xlu0 %v694, 32
    %v697 = vpop.permute.xlu0 %696
    %v699 = vadd.f32 %v689, %v697
    %v700 = vtanh.pop %v699
    %702 = vrot.lane.b32.xlu0 %v700, 32
    %v703 = vpop.permute.xlu0 %702
    %v705 = vmul.f32 %v687, %v703
    %vm706 = vcmp.gt.s32.totalorder %v126, 5
    %v707 = vsel %vm706, 1, 0
    %708 = vset.pattern.permute.xlu0 0
    %709 = vperm.xlu0 %708, %v707
    %v710 = vpop.permute.xlu0 %709
    %vm711 = vcmp.eq.s32.totalorder %v710, 1
    %v712 = vsel %vm711, %v705, %v616
    %v713 = vsel %vm711, %v699, %v617
    %s714 = scalar_lea.vmem %s1, 12
    %v715 = vld [vmem:[%s714] sm:$0x3]
    %717 = vrot.lane.b32.xlu0 %v712, 64
    %v718 = vpop.permute.xlu0 %717
    %v719 = vsel %vm130, %v718, 0
    %721 = vmatpush.msra.mxu0 0.0
    %722 = vmatpush.msra.mxu0 0.0
    %723 = vmatpush.msra.mxu0 0.0
    %724 = vmatpush.msra.mxu0 0.0
    %725 = vmatpush.msra.mxu0 0.0
    %726 = vmatpush.msra.mxu0 0.0
    %727 = vmatpush.msra.mxu0 0.0
    %728 = vmatpush.msra.mxu0 0.0
    %729 = vmatpush.msra.mxu0 0.0
    %730 = vmatpush.msra.mxu0 0.0
    %731 = vmatpush.msra.mxu0 0.0
    %732 = vmatpush.msra.mxu0 0.0
    %733 = vmatpush.msra.mxu0 %v121
    %734 = vmatpush.msra.mxu0 %v120
    %735 = vmatpush.msra.mxu0 %v119
    %736 = vmatpush.msra.mxu0 %v118
    %737 = vmatmul.f32.gmra.mxu0 %v719
    %v738 = vpop.f32.mrf.mxu0
    %v739 = vadd.f32 0.0, %v738
    %740 = vdwg.mxu0
    %v742 = vsel %vm154, %v715, 0
    %744 = vmatpush.msra.mxu0 0.0
    %745 = vmatpush.msra.mxu0 0.0
    %746 = vmatpush.msra.mxu0 0.0
    %747 = vmatpush.msra.mxu0 0.0
    %748 = vmatpush.msra.mxu0 0.0
    %749 = vmatpush.msra.mxu0 0.0
    %750 = vmatpush.msra.mxu0 0.0
    %751 = vmatpush.msra.mxu0 0.0
    %752 = vmatpush.msra.mxu0 0.0
    %753 = vmatpush.msra.mxu0 0.0
    %754 = vmatpush.msra.mxu0 0.0
    %755 = vmatpush.msra.mxu0 0.0
    %756 = vmatpush.msra.mxu0 0.0
    %757 = vmatpush.msra.mxu0 0.0
    %758 = vmatpush.msra.mxu0 0.0
    %759 = vmatpush.msra.mxu0 %v117
    %760 = vmatmul.f32.gmra.mxu0 %v742
    %v761 = vpop.f32.mrf.mxu0
    %v762 = vadd.f32 %v739, %v761
    %763 = vdwg.mxu0
    %v764 = vadd.f32 %v762, %v179
    %v765 = vxor.u32 %v764, 2147483648
    %v766 = vmul.f32 %v765, 1.442695
    %v767 = vpow.pop %v766
    %v768 = vadd.f32 %v767, 1.0
    %v769 = vrcp.pop %v768
    %v770 = vmul.f32 %v768, %v769
    %v771 = vsub.f32 1.0, %v770
    %v772 = vmul.f32 %v769, %v771
    %v773 = vadd.f32 %v769, %v772
    %vm774 = vweird.f32 %v768
    %vm775 = vweird.f32 %v769
    %vm776 = vmor %vm774, %vm775
    %v777 = vsel %vm776, %v769, %v773
    %v778 = vand.u32 2147483647, %v768
    %vm779 = vcmp.eq.f32.partialorder %v778, 8.507059e+37
    %v780 = vand.u32 %v768, 2147483648
    %v781 = vor.u32 1.1754944e-38, %v780
    %v782 = vsel %vm779, %v781, %v777
    %v783 = vmul.f32 1.0, %v782
    %v784 = vtanh.pop %v764
    %v785 = vmul.f32 %v783, %v713
    %787 = vrot.lane.b32.xlu0 %v784, 32
    %v788 = vpop.permute.xlu0 %787
    %v790 = vmul.f32 %v783, %v788
    %792 = vrot.lane.b32.xlu0 %v790, 32
    %v793 = vpop.permute.xlu0 %792
    %v795 = vadd.f32 %v785, %v793
    %v796 = vtanh.pop %v795
    %798 = vrot.lane.b32.xlu0 %v796, 32
    %v799 = vpop.permute.xlu0 %798
    %v801 = vmul.f32 %v783, %v799
    %vm802 = vcmp.gt.s32.totalorder %v126, 6
    %v803 = vsel %vm802, 1, 0
    %804 = vset.pattern.permute.xlu0 0
    %805 = vperm.xlu0 %804, %v803
    %v806 = vpop.permute.xlu0 %805
    %vm807 = vcmp.eq.s32.totalorder %v806, 1
    %v808 = vsel %vm807, %v801, %v712
    %v809 = vsel %vm807, %v795, %v713
    %s810 = scalar_lea.vmem %s1, 14
    %v811 = vld [vmem:[%s810] sm:$0x3]
    %813 = vrot.lane.b32.xlu0 %v808, 64
    %v814 = vpop.permute.xlu0 %813
    %v815 = vsel %vm130, %v814, 0
    %817 = vmatpush.msra.mxu0 0.0
    %818 = vmatpush.msra.mxu0 0.0
    %819 = vmatpush.msra.mxu0 0.0
    %820 = vmatpush.msra.mxu0 0.0
    %821 = vmatpush.msra.mxu0 0.0
    %822 = vmatpush.msra.mxu0 0.0
    %823 = vmatpush.msra.mxu0 0.0
    %824 = vmatpush.msra.mxu0 0.0
    %825 = vmatpush.msra.mxu0 0.0
    %826 = vmatpush.msra.mxu0 0.0
    %827 = vmatpush.msra.mxu0 0.0
    %828 = vmatpush.msra.mxu0 0.0
    %829 = vmatpush.msra.mxu0 %v121
    %830 = vmatpush.msra.mxu0 %v120
    %831 = vmatpush.msra.mxu0 %v119
    %832 = vmatpush.msra.mxu0 %v118
    %833 = vmatmul.f32.gmra.mxu0 %v815
    %v834 = vpop.f32.mrf.mxu0
    %v835 = vadd.f32 0.0, %v834
    %836 = vdwg.mxu0
    %v838 = vsel %vm154, %v811, 0
    %840 = vmatpush.msra.mxu0 0.0
    %841 = vmatpush.msra.mxu0 0.0
    %842 = vmatpush.msra.mxu0 0.0
    %843 = vmatpush.msra.mxu0 0.0
    %844 = vmatpush.msra.mxu0 0.0
    %845 = vmatpush.msra.mxu0 0.0
    %846 = vmatpush.msra.mxu0 0.0
    %847 = vmatpush.msra.mxu0 0.0
    %848 = vmatpush.msra.mxu0 0.0
    %849 = vmatpush.msra.mxu0 0.0
    %850 = vmatpush.msra.mxu0 0.0
    %851 = vmatpush.msra.mxu0 0.0
    %852 = vmatpush.msra.mxu0 0.0
    %853 = vmatpush.msra.mxu0 0.0
    %854 = vmatpush.msra.mxu0 0.0
    %855 = vmatpush.msra.mxu0 %v117
    %856 = vmatmul.f32.gmra.mxu0 %v838
    %v857 = vpop.f32.mrf.mxu0
    %v858 = vadd.f32 %v835, %v857
    %859 = vdwg.mxu0
    %v860 = vadd.f32 %v858, %v179
    %v861 = vxor.u32 %v860, 2147483648
    %v862 = vmul.f32 %v861, 1.442695
    %v863 = vpow.pop %v862
    %v864 = vadd.f32 %v863, 1.0
    %v865 = vrcp.pop %v864
    %v866 = vmul.f32 %v864, %v865
    %v867 = vsub.f32 1.0, %v866
    %v868 = vmul.f32 %v865, %v867
    %v869 = vadd.f32 %v865, %v868
    %vm870 = vweird.f32 %v864
    %vm871 = vweird.f32 %v865
    %vm872 = vmor %vm870, %vm871
    %v873 = vsel %vm872, %v865, %v869
    %v874 = vand.u32 2147483647, %v864
    %vm875 = vcmp.eq.f32.partialorder %v874, 8.507059e+37
    %v876 = vand.u32 %v864, 2147483648
    %v877 = vor.u32 1.1754944e-38, %v876
    %v878 = vsel %vm875, %v877, %v873
    %v879 = vmul.f32 1.0, %v878
    %v880 = vtanh.pop %v860
    %v881 = vmul.f32 %v879, %v809
    %883 = vrot.lane.b32.xlu0 %v880, 32
    %v884 = vpop.permute.xlu0 %883
    %v886 = vmul.f32 %v879, %v884
    %888 = vrot.lane.b32.xlu0 %v886, 32
    %v889 = vpop.permute.xlu0 %888
    %v891 = vadd.f32 %v881, %v889
    %v892 = vtanh.pop %v891
    %894 = vrot.lane.b32.xlu0 %v892, 32
    %v895 = vpop.permute.xlu0 %894
    %v897 = vmul.f32 %v879, %v895
    %vm898 = vcmp.gt.s32.totalorder %v126, 7
    %v899 = vsel %vm898, 1, 0
    %900 = vset.pattern.permute.xlu0 0
    %901 = vperm.xlu0 %900, %v899
    %v902 = vpop.permute.xlu0 %901
    %vm903 = vcmp.eq.s32.totalorder %v902, 1
    %v904 = vsel %vm903, %v897, %v808
    %v905 = vsel %vm903, %v891, %v809
    %907 = vrot.lane.b32.xlu0 %v904, 64
    %v908 = vpop.permute.xlu0 %907
    %vm910 = vcmask 254976
    %911 = vst.msk [vmem:[#allocation2] sm:$0x3] %vm910, %v908
    %913 = vrot.lane.b32.xlu0 %v905, 96
    %v914 = vpop.permute.xlu0 %913
    %916 = vst.msk [vmem:[#allocation3] sm:$0x3] %vm910, %v914
    // Predicated region
    $region66: #{losnet_forward.1} parent=1 // pred_check
      %p917 = pneg %p110
    $region67: #{losnet_forward.1} parent=1 // pred_check_branch
      %919 = sbr.rel (%p917) target = $region69
    $region68: #{losnet_forward.1} parent=1 // pred_region
      %v920 = vld [vmem:[%s5] sm:$0x3]
      %v921 = vmul.f32 %v920, -0.105360515
      %v922 = vmul.f32 %v921, 1.442695
      %v923 = vpow.pop %v922
      %v924 = vperm.slane %v923, 0
      %v925 = vlaneseq
      %v926 = vshrl.u32 %v925, 7
      %928 = vset.pattern.permute.xlu0 %v926
      %929 = vperm.xlu0 %928, %v924
      %v930 = vpop.permute.xlu0 %929
      %v931 = vperm.slane %v923, 1
      %v932 = vlaneseq
      %v933 = vshrl.u32 %v932, 7
      %935 = vset.pattern.permute.xlu0 %v933
      %936 = vperm.xlu0 %935, %v931
      %v937 = vpop.permute.xlu0 %936
      %v938 = vld [vmem:[#allocation7] sm:$0xff]
      %v939 = vld [vmem:[#allocation7 + $0x8] sm:$0xff]
      %v940 = vld [vmem:[#allocation7 + $0x10] sm:$0xff]
      %v941 = vld [vmem:[#allocation7 + $0x18] sm:$0xff]
      %v942 = vld [vmem:[#allocation7 + $0x20] sm:$0xff]
      %v943 = vld [vmem:[#allocation7 + $0x28] sm:$0xff]
      %950 = vst [vmem:[#allocation1] ss:$2 sm:$0xff] %v938
      %s951 = scalar_lea.vmem [#allocation1], 16
      %952 = vst [vmem:[%s951] ss:$2 sm:$0xff] %v939
      %s953 = scalar_lea.vmem [#allocation1], 32
      %954 = vst [vmem:[%s953] ss:$2 sm:$0xff] %v940
      %v955 = vld.sshfl [vmem:[#allocation1] sm:$0xff pattern:$0x75316420]
      %v956 = vld.sshfl [vmem:[#allocation1 + $0x8] sm:$0xff pattern:$0x75316420]
      %v957 = vld.sshfl [vmem:[#allocation1 + $0x10] sm:$0xff pattern:$0x75316420]
      %v958 = vld.sshfl [vmem:[#allocation1 + $0x18] sm:$0xff pattern:$0x75316420]
      %v959 = vld.sshfl [vmem:[#allocation1 + $0x20] sm:$0xff pattern:$0x75316420]
      %v960 = vld.sshfl [vmem:[#allocation1 + $0x28] sm:$0xff pattern:$0x75316420]
      %s961 = scalar_lea.vmem [#allocation1], 48
      %962 = vst [vmem:[%s961] ss:$2 sm:$0xff] %v941
      %v963 = vld.sshfl [vmem:[#allocation1 + $0x30] sm:$0xff pattern:$0x75316420]
      %v964 = vld.sshfl [vmem:[#allocation1 + $0x38] sm:$0xff pattern:$0x75316420]
      %965 = vst [vmem:[#allocation1] ss:$2 sm:$0xff] %v942
      %966 = vst [vmem:[%s951] ss:$2 sm:$0xff] %v943
      %v967 = vld.sshfl [vmem:[#allocation1] sm:$0xff pattern:$0x75316420]
      %v968 = vld.sshfl [vmem:[#allocation1 + $0x8] sm:$0xff pattern:$0x75316420]
      %v969 = vld.sshfl [vmem:[#allocation1 + $0x10] sm:$0xff pattern:$0x75316420]
      %v970 = vld.sshfl [vmem:[#allocation1 + $0x18] sm:$0xff pattern:$0x75316420]
      %v983 = vmul.f32 %v930, %v955
      %v984 = vmul.f32 %v930, %v956
      %v985 = vmul.f32 %v930, %v957
      %v986 = vmul.f32 %v930, %v958
      %v987 = vmul.f32 %v930, %v959
      %v988 = vmul.f32 %v930, %v960
      %v989 = vmul.f32 %v937, %v963
      %v990 = vmul.f32 %v937, %v964
      %v991 = vmul.f32 %v937, %v967
      %v992 = vmul.f32 %v937, %v968
      %v993 = vmul.f32 %v937, %v969
      %v994 = vmul.f32 %v937, %v970
      %vm995 = vcmask 1043456
      %v996 = vsel %vm995, %v983, 0.0
      %v997 = vrot.slane %v996, 4
      %v998 = vadd.f32 %v996, %v997
      %v999 = vrot.slane %v998, 2
      %v1000 = vadd.f32 %v998, %v999
      %v1001 = vrot.slane %v1000, 1
      %v1002 = vadd.f32 %v1000, %v1001
      %v1003 = vsel %vm995, %v984, 0.0
      %v1004 = vrot.slane %v1003, 4
      %v1005 = vadd.f32 %v1003, %v1004
      %v1006 = vrot.slane %v1005, 2
      %v1007 = vadd.f32 %v1005, %v1006
      %v1008 = vrot.slane %v1007, 1
      %v1009 = vadd.f32 %v1007, %v1008
      %v1010 = vsel %vm995, %v985, 0.0
      %v1011 = vrot.slane %v1010, 4
      %v1012 = vadd.f32 %v1010, %v1011
      %v1013 = vrot.slane %v1012, 2
      %v1014 = vadd.f32 %v1012, %v1013
      %v1015 = vrot.slane %v1014, 1
      %v1016 = vadd.f32 %v1014, %v1015
      %v1017 = vsel %vm995, %v986, 0.0
      %v1018 = vrot.slane %v1017, 4
      %v1019 = vadd.f32 %v1017, %v1018
      %v1020 = vrot.slane %v1019, 2
      %v1021 = vadd.f32 %v1019, %v1020
      %v1022 = vrot.slane %v1021, 1
      %v1023 = vadd.f32 %v1021, %v1022
      %v1024 = vsel %vm995, %v987, 0.0
      %v1025 = vrot.slane %v1024, 4
      %v1026 = vadd.f32 %v1024, %v1025
      %v1027 = vrot.slane %v1026, 2
      %v1028 = vadd.f32 %v1026, %v1027
      %v1029 = vrot.slane %v1028, 1
      %v1030 = vadd.f32 %v1028, %v1029
      %v1031 = vsel %vm995, %v988, 0.0
      %v1032 = vrot.slane %v1031, 4
      %v1033 = vadd.f32 %v1031, %v1032
      %v1034 = vrot.slane %v1033, 2
      %v1035 = vadd.f32 %v1033, %v1034
      %v1036 = vrot.slane %v1035, 1
      %v1037 = vadd.f32 %v1035, %v1036
      %v1038 = vsel %vm995, %v989, 0.0
      %v1039 = vrot.slane %v1038, 4
      %v1040 = vadd.f32 %v1038, %v1039
      %v1041 = vrot.slane %v1040, 2
      %v1042 = vadd.f32 %v1040, %v1041
      %v1043 = vrot.slane %v1042, 1
      %v1044 = vadd.f32 %v1042, %v1043
      %v1045 = vsel %vm995, %v990, 0.0
      %v1046 = vrot.slane %v1045, 4
      %v1047 = vadd.f32 %v1045, %v1046
      %v1048 = vrot.slane %v1047, 2
      %v1049 = vadd.f32 %v1047, %v1048
      %v1050 = vrot.slane %v1049, 1
      %v1051 = vadd.f32 %v1049, %v1050
      %v1052 = vsel %vm995, %v991, 0.0
      %v1053 = vrot.slane %v1052, 4
      %v1054 = vadd.f32 %v1052, %v1053
      %v1055 = vrot.slane %v1054, 2
      %v1056 = vadd.f32 %v1054, %v1055
      %v1057 = vrot.slane %v1056, 1
      %v1058 = vadd.f32 %v1056, %v1057
      %v1059 = vsel %vm995, %v992, 0.0
      %v1060 = vrot.slane %v1059, 4
      %v1061 = vadd.f32 %v1059, %v1060
      %v1062 = vrot.slane %v1061, 2
      %v1063 = vadd.f32 %v1061, %v1062
      %v1064 = vrot.slane %v1063, 1
      %v1065 = vadd.f32 %v1063, %v1064
      %v1066 = vsel %vm995, %v993, 0.0
      %v1067 = vrot.slane %v1066, 4
      %v1068 = vadd.f32 %v1066, %v1067
      %v1069 = vrot.slane %v1068, 2
      %v1070 = vadd.f32 %v1068, %v1069
      %v1071 = vrot.slane %v1070, 1
      %v1072 = vadd.f32 %v1070, %v1071
      %v1073 = vsel %vm995, %v994, 0.0
      %v1074 = vrot.slane %v1073, 4
      %v1075 = vadd.f32 %v1073, %v1074
      %v1076 = vrot.slane %v1075, 2
      %v1077 = vadd.f32 %v1075, %v1076
      %v1078 = vrot.slane %v1077, 1
      %v1079 = vadd.f32 %v1077, %v1078
      %v1080 = vsel %vm910, %v908, 0.0
      %1081 = vadd.xlane.f32.xlu0 %v1080
      %v1082 = vpop.xlane.xlu0 %1081
      %vm1095 = vcmask 1041409
      %v1096 = vsel %vm1095, %v1044, %v1002
      %v1097 = vsel %vm1095, %v1051, %v1009
      %v1098 = vsel %vm1095, %v1058, %v1016
      %v1099 = vsel %vm1095, %v1065, %v1023
      %v1100 = vsel %vm1095, %v1072, %v1030
      %v1101 = vsel %vm1095, %v1079, %v1037
      %vm1108 = vcmask 1041408
      %v1109 = vsel %vm1108, %v1096, 0.0
      %v1110 = vsel %vm1108, %v1097, 0.0
      %v1111 = vadd.f32 %v1109, %v1110
      %v1112 = vsel %vm1108, %v1098, 0.0
      %v1113 = vadd.f32 %v1111, %v1112
      %v1114 = vsel %vm1108, %v1099, 0.0
      %v1115 = vadd.f32 %v1113, %v1114
      %v1116 = vsel %vm1108, %v1100, 0.0
      %v1117 = vadd.f32 %v1115, %v1116
      %v1118 = vsel %vm1108, %v1101, 0.0
      %v1119 = vadd.f32 %v1117, %v1118
      %1120 = vadd.xlane.f32.xlu0 %v1119
      %v1121 = vpop.xlane.xlu0 %1120
      %v1122 = vadd.f32 %v1082, %v1121
      %v1123 = vmul.f32 %v1122, 0.00125
      %v1124 = vsub.f32 %v904, %v1123
      %v1126 = vrot.slane %v1123, 1
      %v1129 = vsub.f32 %v1002, %v1123
      %v1130 = vsub.f32 %v1009, %v1123
      %v1131 = vsub.f32 %v1016, %v1123
      %v1132 = vsub.f32 %v1023, %v1123
      %v1133 = vsub.f32 %v1030, %v1123
      %v1134 = vsub.f32 %v1037, %v1123
      %v1135 = vsub.f32 %v1044, %v1126
      %v1136 = vsub.f32 %v1051, %v1126
      %v1137 = vsub.f32 %v1058, %v1126
      %v1138 = vsub.f32 %v1065, %v1126
      %v1139 = vsub.f32 %v1072, %v1126
      %v1140 = vsub.f32 %v1079, %v1126
      %v1141 = vmul.f32 %v1124, %v1124
      %1143 = vrot.lane.b32.xlu0 %v1141, 64
      %v1144 = vpop.permute.xlu0 %1143
      %v1146 = vsel %vm910, %v1144, 0.0
      %1147 = vadd.xlane.f32.xlu0 %v1146
      %v1148 = vpop.xlane.xlu0 %1147
      %v1149 = vmul.f32 %v1129, %v1129
      %v1150 = vmul.f32 %v1130, %v1130
      %v1151 = vmul.f32 %v1131, %v1131
      %v1152 = vmul.f32 %v1132, %v1132
      %v1153 = vmul.f32 %v1133, %v1133
      %v1154 = vmul.f32 %v1134, %v1134
      %v1155 = vmul.f32 %v1135, %v1135
      %v1156 = vmul.f32 %v1136, %v1136
      %v1157 = vmul.f32 %v1137, %v1137
      %v1158 = vmul.f32 %v1138, %v1138
      %v1159 = vmul.f32 %v1139, %v1139
      %v1160 = vmul.f32 %v1140, %v1140
      %v1173 = vrot.slane %v1155, 7
      %v1174 = vsel %vm1095, %v1173, %v1149
      %v1175 = vrot.slane %v1156, 7
      %v1176 = vsel %vm1095, %v1175, %v1150
      %v1177 = vrot.slane %v1157, 7
      %v1178 = vsel %vm1095, %v1177, %v1151
      %v1179 = vrot.slane %v1158, 7
      %v1180 = vsel %vm1095, %v1179, %v1152
      %v1181 = vrot.slane %v1159, 7
      %v1182 = vsel %vm1095, %v1181, %v1153
      %v1183 = vrot.slane %v1160, 7
      %v1184 = vsel %vm1095, %v1183, %v1154
      %v1191 = vsel %vm1108, %v1174, 0.0
      %v1192 = vsel %vm1108, %v1176, 0.0
      %v1193 = vadd.f32 %v1191, %v1192
      %v1194 = vsel %vm1108, %v1178, 0.0
      %v1195 = vadd.f32 %v1193, %v1194
      %v1196 = vsel %vm1108, %v1180, 0.0
      %v1197 = vadd.f32 %v1195, %v1196
      %v1198 = vsel %vm1108, %v1182, 0.0
      %v1199 = vadd.f32 %v1197, %v1198
      %v1200 = vsel %vm1108, %v1184, 0.0
      %v1201 = vadd.f32 %v1199, %v1200
      %1202 = vadd.xlane.f32.xlu0 %v1201
      %v1203 = vpop.xlane.xlu0 %1202
      %v1204 = vadd.f32 %v1148, %v1203
      %v1205 = vmul.f32 %v1204, 0.00125
      %v1206 = vadd.f32 %v1205, 1e-05
      %v1207 = vrsqrt.pop %v1206
      %v1208 = vmul.f32 %v1207, %v1206
      %v1209 = vmul.f32 %v1208, %v1207
      %v1210 = vmul.f32 0.5, %v1209
      %v1211 = vsub.f32 1.5, %v1210
      %v1212 = vmul.f32 %v1207, %v1211
      %vm1213 = vweird.f32 %v1206
      %vm1214 = vweird.f32 %v1207
      %vm1215 = vmor %vm1213, %vm1214
      %v1216 = vsel %vm1215, %v1207, %v1212
      %v1217 = vmul.f32 %v1124, %v1216
      %v1219 = vrot.slane %v1216, 1
      %v1222 = vmul.f32 %v1129, %v1216
      %v1223 = vmul.f32 %v1130, %v1216
      %v1224 = vmul.f32 %v1131, %v1216
      %v1225 = vmul.f32 %v1132, %v1216
      %v1226 = vmul.f32 %v1133, %v1216
      %v1227 = vmul.f32 %v1134, %v1216
      %v1228 = vmul.f32 %v1135, %v1219
      %v1229 = vmul.f32 %v1136, %v1219
      %v1230 = vmul.f32 %v1137, %v1219
      %v1231 = vmul.f32 %v1138, %v1219
      %v1232 = vmul.f32 %v1139, %v1219
      %v1233 = vmul.f32 %v1140, %v1219
      %v1234 = vld [vmem:[#allocation9] sm:$0xff]
      %v1235 = vld [vmem:[#allocation9 + $0x8] sm:$0xff]
      %v1236 = vld [vmem:[#allocation9 + $0x10] sm:$0xff]
      %v1237 = vld [vmem:[#allocation9 + $0x18] sm:$0xff]
      %v1238 = vld [vmem:[#allocation10] sm:$0xff]
      %v1239 = vld [vmem:[#allocation10 + $0x8] sm:$0xff]
      %v1240 = vld [vmem:[#allocation10 + $0x10] sm:$0xff]
      %v1241 = vld [vmem:[#allocation10 + $0x18] sm:$0xff]
      %v1242 = vld [vmem:[#allocation10 + $0x20] sm:$0xff]
      %v1243 = vld [vmem:[#allocation10 + $0x28] sm:$0xff]
      %v1244 = vld [vmem:[#allocation10 + $0x30] sm:$0xff]
      %v1245 = vld [vmem:[#allocation10 + $0x38] sm:$0xff]
      %v1246 = vld [vmem:[#allocation10 + $0x40] sm:$0xff]
      %v1247 = vld [vmem:[#allocation10 + $0x48] sm:$0xff]
      %v1248 = vld [vmem:[#allocation10 + $0x50] sm:$0xff]
      %v1249 = vld [vmem:[#allocation10 + $0x58] sm:$0xff]
      %v1250 = vld [vmem:[#allocation10 + $0x60] sm:$0xff]
      %v1251 = vld [vmem:[#allocation10 + $0x68] sm:$0xff]
      %v1252 = vld [vmem:[#allocation10 + $0x70] sm:$0xff]
      %v1253 = vld [vmem:[#allocation10 + $0x78] sm:$0xff]
      %v1254 = vld [vmem:[#allocation10 + $0x80] sm:$0xff]
      %v1255 = vld [vmem:[#allocation10 + $0x88] sm:$0xff]
      %v1256 = vld [vmem:[#allocation10 + $0x90] sm:$0xff]
      %v1257 = vld [vmem:[#allocation10 + $0x98] sm:$0xff]
      %v1258 = vld [vmem:[#allocation10 + $0xa0] sm:$0xff]
      %v1259 = vld [vmem:[#allocation10 + $0xa8] sm:$0xff]
      %v1260 = vld [vmem:[#allocation10 + $0xb0] sm:$0xff]
      %v1261 = vld [vmem:[#allocation10 + $0xb8] sm:$0xff]
      %v1262 = vld [vmem:[#allocation10 + $0xc0] sm:$0xff]
      %v1263 = vld [vmem:[#allocation10 + $0xc8] sm:$0xff]
      %v1264 = vld [vmem:[#allocation10 + $0xd0] sm:$0xff]
      %v1265 = vld [vmem:[#allocation10 + $0xd8] sm:$0xff]
      %v1266 = vld [vmem:[#allocation10 + $0xe0] sm:$0xff]
      %v1267 = vld [vmem:[#allocation10 + $0xe8] sm:$0xff]
      %v1268 = vld [vmem:[#allocation10 + $0xf0] sm:$0xff]
      %v1269 = vld [vmem:[#allocation10 + $0xf8] sm:$0xff]
      %v1270 = vld [vmem:[#allocation10 + $0x100] sm:$0xff]
      %v1271 = vld [vmem:[#allocation10 + $0x108] sm:$0xff]
      %v1272 = vld [vmem:[#allocation10 + $0x110] sm:$0xff]
      %v1273 = vld [vmem:[#allocation10 + $0x118] sm:$0xff]
      %v1274 = vld [vmem:[#allocation10 + $0x120] sm:$0xff]
      %v1275 = vld [vmem:[#allocation10 + $0x128] sm:$0xff]
      %v1276 = vld [vmem:[#allocation10 + $0x130] sm:$0xff]
      %v1277 = vld [vmem:[#allocation10 + $0x138] sm:$0xff]
      %v1278 = vld [vmem:[#allocation10 + $0x140] sm:$0xff]
      %v1279 = vld [vmem:[#allocation10 + $0x148] sm:$0xff]
      %v1280 = vld [vmem:[#allocation10 + $0x150] sm:$0xff]
      %v1281 = vld [vmem:[#allocation10 + $0x158] sm:$0xff]
      %v1282 = vld [vmem:[#allocation10 + $0x160] sm:$0xff]
      %v1283 = vld [vmem:[#allocation10 + $0x168] sm:$0xff]
      %v1284 = vld [vmem:[#allocation10 + $0x170] sm:$0xff]
      %v1285 = vld [vmem:[#allocation10 + $0x178] sm:$0xff]
      %v1286 = vld [vmem:[#allocation10 + $0x180] sm:$0xff]
      %v1287 = vld [vmem:[#allocation10 + $0x188] sm:$0xff]
      %v1288 = vld [vmem:[#allocation10 + $0x190] sm:$0xff]
      %v1289 = vld [vmem:[#allocation10 + $0x198] sm:$0xff]
      %v1290 = vld [vmem:[#allocation10 + $0x1a0] sm:$0xff]
      %v1291 = vld [vmem:[#allocation10 + $0x1a8] sm:$0xff]
      %v1292 = vld [vmem:[#allocation10 + $0x1b0] sm:$0xff]
      %v1293 = vld [vmem:[#allocation10 + $0x1b8] sm:$0xff]
      %v1294 = vld [vmem:[#allocation10 + $0x1c0] sm:$0xff]
      %v1295 = vld [vmem:[#allocation10 + $0x1c8] sm:$0xff]
      %v1296 = vld [vmem:[#allocation10 + $0x1d0] sm:$0xff]
      %v1297 = vld [vmem:[#allocation10 + $0x1d8] sm:$0xff]
      %v1298 = vld [vmem:[#allocation10 + $0x1e0] sm:$0xff]
      %v1299 = vld [vmem:[#allocation10 + $0x1e8] sm:$0xff]
      %v1300 = vld [vmem:[#allocation10 + $0x1f0] sm:$0xff]
      %v1301 = vld [vmem:[#allocation10 + $0x1f8] sm:$0xff]
      %v1302 = vld [vmem:[#allocation10 + $0x200] sm:$0xff]
      %v1303 = vld [vmem:[#allocation10 + $0x208] sm:$0xff]
      %v1304 = vld [vmem:[#allocation10 + $0x210] sm:$0xff]
      %v1305 = vld [vmem:[#allocation10 + $0x218] sm:$0xff]
      %v1306 = vld [vmem:[#allocation10 + $0x220] sm:$0xff]
      %v1307 = vld [vmem:[#allocation10 + $0x228] sm:$0xff]
      %v1308 = vld [vmem:[#allocation10 + $0x230] sm:$0xff]
      %v1309 = vld [vmem:[#allocation10 + $0x238] sm:$0xff]
      %v1310 = vld [vmem:[#allocation10 + $0x240] sm:$0xff]
      %v1311 = vld [vmem:[#allocation10 + $0x248] sm:$0xff]
      %v1312 = vld [vmem:[#allocation10 + $0x250] sm:$0xff]
      %v1313 = vld [vmem:[#allocation10 + $0x258] sm:$0xff]
      %v1314 = vld [vmem:[#allocation10 + $0x260] sm:$0xff]
      %v1315 = vld [vmem:[#allocation10 + $0x268] sm:$0xff]
      %v1316 = vld [vmem:[#allocation10 + $0x270] sm:$0xff]
      %v1317 = vld [vmem:[#allocation10 + $0x278] sm:$0xff]
      %v1318 = vld [vmem:[#allocation10 + $0x280] sm:$0xff]
      %v1319 = vld [vmem:[#allocation10 + $0x288] sm:$0xff]
      %v1320 = vld [vmem:[#allocation10 + $0x290] sm:$0xff]
      %v1321 = vld [vmem:[#allocation10 + $0x298] sm:$0xff]
      %v1322 = vld [vmem:[#allocation10 + $0x2a0] sm:$0xff]
      %v1323 = vld [vmem:[#allocation10 + $0x2a8] sm:$0xff]
      %v1324 = vld [vmem:[#allocation10 + $0x2b0] sm:$0xff]
      %v1325 = vld [vmem:[#allocation10 + $0x2b8] sm:$0xff]
      %v1326 = vld [vmem:[#allocation10 + $0x2c0] sm:$0xff]
      %v1327 = vld [vmem:[#allocation10 + $0x2c8] sm:$0xff]
      %v1328 = vld [vmem:[#allocation10 + $0x2d0] sm:$0xff]
      %v1329 = vld [vmem:[#allocation10 + $0x2d8] sm:$0xff]
      %v1330 = vld [vmem:[#allocation10 + $0x2e0] sm:$0xff]
      %v1331 = vld [vmem:[#allocation10 + $0x2e8] sm:$0xff]
      %v1332 = vld [vmem:[#allocation10 + $0x2f0] sm:$0xff]
      %v1333 = vld [vmem:[#allocation10 + $0x2f8] sm:$0xff]
      %v1346 = vrot.slane %v1228, 7
      %v1347 = vsel %vm1095, %v1346, %v1222
      %v1348 = vrot.slane %v1229, 7
      %v1349 = vsel %vm1095, %v1348, %v1223
      %v1350 = vrot.slane %v1230, 7
      %v1351 = vsel %vm1095, %v1350, %v1224
      %v1352 = vrot.slane %v1231, 7
      %v1353 = vsel %vm1095, %v1352, %v1225
      %v1354 = vrot.slane %v1232, 7
      %v1355 = vsel %vm1095, %v1354, %v1226
      %v1356 = vrot.slane %v1233, 7
      %v1357 = vsel %vm1095, %v1356, %v1227
      %1364 = vmatpush.msra.mxu0 %v1253
      %1365 = vmatpush.msra.mxu0 %v1252
      %1366 = vmatpush.msra.mxu0 %v1251
      %1367 = vmatpush.msra.mxu0 %v1250
      %1368 = vmatpush.msra.mxu0 %v1249
      %1369 = vmatpush.msra.mxu0 %v1248
      %1370 = vmatpush.msra.mxu0 %v1247
      %1371 = vmatpush.msra.mxu0 %v1246
      %1372 = vmatpush.msra.mxu0 %v1245
      %1373 = vmatpush.msra.mxu0 %v1244
      %1374 = vmatpush.msra.mxu0 %v1243
      %1375 = vmatpush.msra.mxu0 %v1242
      %1376 = vmatpush.msra.mxu0 %v1241
      %1377 = vmatpush.msra.mxu0 %v1240
      %1378 = vmatpush.msra.mxu0 %v1239
      %1379 = vmatpush.msra.mxu0 %v1238
      %1380 = vmatmul.f32.gmra.mxu0 %v1347
      %v1381 = vpop.f32.mrf.mxu0
      %v1382 = vadd.f32 0.0, %v1381
      %1383 = vdwg.mxu0
      %1384 = vmatpush.msra.mxu0 %v1269
      %1385 = vmatpush.msra.mxu0 %v1268
      %1386 = vmatpush.msra.mxu0 %v1267
      %1387 = vmatpush.msra.mxu0 %v1266
      %1388 = vmatpush.msra.mxu0 %v1265
      %1389 = vmatpush.msra.mxu0 %v1264
      %1390 = vmatpush.msra.mxu0 %v1263
      %1391 = vmatpush.msra.mxu0 %v1262
      %1392 = vmatpush.msra.mxu0 %v1261
      %1393 = vmatpush.msra.mxu0 %v1260
      %1394 = vmatpush.msra.mxu0 %v1259
      %1395 = vmatpush.msra.mxu0 %v1258
      %1396 = vmatpush.msra.mxu0 %v1257
      %1397 = vmatpush.msra.mxu0 %v1256
      %1398 = vmatpush.msra.mxu0 %v1255
      %1399 = vmatpush.msra.mxu0 %v1254
      %1400 = vmatmul.f32.gmra.mxu0 %v1349
      %v1401 = vpop.f32.mrf.mxu0
      %v1402 = vadd.f32 %v1382, %v1401
      %1403 = vdwg.mxu0
      %1404 = vmatpush.msra.mxu0 %v1285
      %1405 = vmatpush.msra.mxu0 %v1284
      %1406 = vmatpush.msra.mxu0 %v1283
      %1407 = vmatpush.msra.mxu0 %v1282
      %1408 = vmatpush.msra.mxu0 %v1281
      %1409 = vmatpush.msra.mxu0 %v1280
      %1410 = vmatpush.msra.mxu0 %v1279
      %1411 = vmatpush.msra.mxu0 %v1278
      %1412 = vmatpush.msra.mxu0 %v1277
      %1413 = vmatpush.msra.mxu0 %v1276
      %1414 = vmatpush.msra.mxu0 %v1275
      %1415 = vmatpush.msra.mxu0 %v1274
      %1416 = vmatpush.msra.mxu0 %v1273
      %1417 = vmatpush.msra.mxu0 %v1272
      %1418 = vmatpush.msra.mxu0 %v1271
      %1419 = vmatpush.msra.mxu0 %v1270
      %1420 = vmatmul.f32.gmra.mxu0 %v1351
      %v1421 = vpop.f32.mrf.mxu0
      %v1422 = vadd.f32 %v1402, %v1421
      %1423 = vdwg.mxu0
      %1424 = vmatpush.msra.mxu0 %v1301
      %1425 = vmatpush.msra.mxu0 %v1300
      %1426 = vmatpush.msra.mxu0 %v1299
      %1427 = vmatpush.msra.mxu0 %v1298
      %1428 = vmatpush.msra.mxu0 %v1297
      %1429 = vmatpush.msra.mxu0 %v1296
      %1430 = vmatpush.msra.mxu0 %v1295
      %1431 = vmatpush.msra.mxu0 %v1294
      %1432 = vmatpush.msra.mxu0 %v1293
      %1433 = vmatpush.msra.mxu0 %v1292
      %1434 = vmatpush.msra.mxu0 %v1291
      %1435 = vmatpush.msra.mxu0 %v1290
      %1436 = vmatpush.msra.mxu0 %v1289
      %1437 = vmatpush.msra.mxu0 %v1288
      %1438 = vmatpush.msra.mxu0 %v1287
      %1439 = vmatpush.msra.mxu0 %v1286
      %1440 = vmatmul.f32.gmra.mxu0 %v1353
      %v1441 = vpop.f32.mrf.mxu0
      %v1442 = vadd.f32 %v1422, %v1441
      %1443 = vdwg.mxu0
      %1444 = vmatpush.msra.mxu0 %v1317
      %1445 = vmatpush.msra.mxu0 %v1316
      %1446 = vmatpush.msra.mxu0 %v1315
      %1447 = vmatpush.msra.mxu0 %v1314
      %1448 = vmatpush.msra.mxu0 %v1313
      %1449 = vmatpush.msra.mxu0 %v1312
      %1450 = vmatpush.msra.mxu0 %v1311
      %1451 = vmatpush.msra.mxu0 %v1310
      %1452 = vmatpush.msra.mxu0 %v1309
      %1453 = vmatpush.msra.mxu0 %v1308
      %1454 = vmatpush.msra.mxu0 %v1307
      %1455 = vmatpush.msra.mxu0 %v1306
      %1456 = vmatpush.msra.mxu0 %v1305
      %1457 = vmatpush.msra.mxu0 %v1304
      %1458 = vmatpush.msra.mxu0 %v1303
      %1459 = vmatpush.msra.mxu0 %v1302
      %1460 = vmatmul.f32.gmra.mxu0 %v1355
      %v1461 = vpop.f32.mrf.mxu0
      %v1462 = vadd.f32 %v1442, %v1461
      %1463 = vdwg.mxu0
      %1464 = vmatpush.msra.mxu0 %v1333
      %1465 = vmatpush.msra.mxu0 %v1332
      %1466 = vmatpush.msra.mxu0 %v1331
      %1467 = vmatpush.msra.mxu0 %v1330
      %1468 = vmatpush.msra.mxu0 %v1329
      %1469 = vmatpush.msra.mxu0 %v1328
      %1470 = vmatpush.msra.mxu0 %v1327
      %1471 = vmatpush.msra.mxu0 %v1326
      %1472 = vmatpush.msra.mxu0 %v1325
      %1473 = vmatpush.msra.mxu0 %v1324
      %1474 = vmatpush.msra.mxu0 %v1323
      %1475 = vmatpush.msra.mxu0 %v1322
      %1476 = vmatpush.msra.mxu0 %v1321
      %1477 = vmatpush.msra.mxu0 %v1320
      %1478 = vmatpush.msra.mxu0 %v1319
      %1479 = vmatpush.msra.mxu0 %v1318
      %1480 = vmatmul.f32.gmra.mxu0 %v1357
      %v1481 = vpop.f32.mrf.mxu0
      %v1482 = vadd.f32 %v1462, %v1481
      %1483 = vdwg.mxu0
      %1485 = vrot.lane.b32.xlu0 %v1217, 64
      %v1486 = vpop.permute.xlu0 %1485
      %v1487 = vsel %vm130, %v1486, 0
      %1489 = vmatpush.msra.mxu0 0.0
      %1490 = vmatpush.msra.mxu0 0.0
      %1491 = vmatpush.msra.mxu0 0.0
      %1492 = vmatpush.msra.mxu0 0.0
      %1493 = vmatpush.msra.mxu0 0.0
      %1494 = vmatpush.msra.mxu0 0.0
      %1495 = vmatpush.msra.mxu0 0.0
      %1496 = vmatpush.msra.mxu0 0.0
      %1497 = vmatpush.msra.mxu0 0.0
      %1498 = vmatpush.msra.mxu0 0.0
      %1499 = vmatpush.msra.mxu0 0.0
      %1500 = vmatpush.msra.mxu0 0.0
      %1501 = vmatpush.msra.mxu0 %v1237
      %1502 = vmatpush.msra.mxu0 %v1236
      %1503 = vmatpush.msra.mxu0 %v1235
      %1504 = vmatpush.msra.mxu0 %v1234
      %1505 = vmatmul.f32.gmra.mxu0 %v1487
      %v1506 = vpop.f32.mrf.mxu0
      %v1507 = vadd.f32 %v1482, %v1506
      %1508 = vdwg.mxu0
      %v1509 = vld [vmem:[#allocation12] sm:$0x1]
      %v1511 = vperm.slane %v1509, 0
      %v1513 = vadd.f32 %v1507, %v1511
      %v1514 = vmax.f32 %v1513, 0.0
      %1515 = vst [vmem:[#allocation13] sm:$0x3] %v1514
    $region69: #{losnet_forward.1} parent=1 // pred_fallthru
      _
    // Predicated region
    $region70: #{losnet_forward.1} parent=1 // pred_check
      _
    $region71: #{losnet_forward.1} parent=1 // pred_check_branch
      %1517 = sbr.rel (0) target = $region73
    $region72: #{losnet_forward.1} parent=1 // pred_region
      %1519 = vsyncadd [#allocation6], 0
      %s1521 = sshll.u32 [#allocation13], 4
      %s1522 = int_to_ptr.vmem [resolvable:$true] %s1521
      %s1523 = sshll.u32 %s10, 4
      %s1524 = int_to_ptr.hbm [resolvable:$true] %s1523
      %1526 = dma.vmem_to_hbm [thread:$0]  %s1522, 32, %s1524, [#allocation6]
    $region73: #{losnet_forward.1} parent=1 // pred_fallthru
      _
    // Predicated region
    $region74: #{losnet_forward.1} parent=1 // pred_check
      _
    $region75: #{losnet_forward.1} parent=1 // pred_check_branch
      %1528 = sbr.rel (0) target = $region77
    $region76: #{losnet_forward.1} parent=1 // pred_region
      %1530 = dma.done [#allocation6], 32
    $region77: #{losnet_forward.1} parent=1 // pred_fallthru
      _
    %1531 = vsyncpa [#allocation5], 1
    %1532 = vsyncpa [#allocation8], 1
    %1533 = vsyncpa [#allocation11], 1
    %1534 = vsyncpa [#allocation6], 1

</llo_original>
